<compile_context>
chip_gen: v7x
topology: tpu7x:2x2x1
jax: 0.10.0
libtpu: 0.0.40
codegen_flags: <defaults>
</compile_context>

<pallas_src>
import functools
import math

import jax
import jax.numpy as jnp
from jax.experimental import pallas as pl
from jax.experimental.pallas import tpu as pltpu


def _qfl_kernel(inv_norm_ref, x_ref, t_ref, o_ref, *, beta):
    # inv_norm_ref: SMEM (1,) scalar-prefetched 1 / clamp(pos_normalizer, 1.0)
    x = x_ref[...].astype(jnp.float32)
    t = t_ref[...].astype(jnp.float32)

    # Share a single exp(-|x|) between sigmoid(x) and the BCE softplus term.
    ax = jnp.abs(x)
    e = jnp.exp(-ax)                        # exp(-|x|)    (EUP)
    s = 1.0 / (1.0 + e)                     # sigmoid(|x|) (one reciprocal)
    pred = jnp.where(x >= 0, s, 1.0 - s)    # sigmoid(x)

    # Numerically-stable BCE-with-logits (== F.binary_cross_entropy_with_logits):
    #   max(x, 0) - x*t + log(1 + exp(-|x|))
    bce = jnp.maximum(x, 0.0) - x * t + jnp.log1p(e)

    # |pred - target| ** beta, specialized at trace time (beta is static).
    d = jnp.abs(pred - t)
    b = float(beta)
    if b == 2.0:
        scale = d * d
    elif b == 1.0:
        scale = d
    elif b.is_integer() and 1.0 < b <= 8.0:
        scale = d
        for _ in range(int(b) - 1):
            scale = scale * d
    else:
        # Non-integer exponent: fall back to pow (exp/log path).
        scale = jnp.power(d, jnp.float32(b))

    o_ref[...] = (bce * scale * inv_norm_ref[0]).astype(o_ref.dtype)


def quality_focal_loss(x, target, pos_normalizer=1.0, beta=2.0, *,
                       target_block_bytes=1 << 20):
    """x: [..., C] logits, target: [..., C] soft labels in [0, 1].

    Matches QualityFocalLoss_.forward elementwise (typically [B, M, C]).
    `beta` must be a static Python number (it is a constructor arg in the
    PyTorch module); `pos_normalizer` may be a Python float or a JAX scalar.
    """
    assert x.shape == target.shape
    orig_shape = x.shape
    n = math.prod(orig_shape) if orig_shape else 1
    C = orig_shape[-1] if orig_shape else 1

    # Choose a lane-dense 2D layout.  Any reshape is valid (elementwise op,
    # scalar normalizer): prefer a width that is a multiple of 128 so stores
    # are unmasked vst's even when C (e.g. 80 detection classes) is not.
    if n % 128 == 0:
        cols = C if (C > 0 and C % 128 == 0) else 128
        rows = n // cols
    else:
        cols = C
        rows = n // C
    x2 = x.reshape(rows, cols)
    t2 = target.reshape(rows, cols)

    # Hoist the normalizer: scalar reciprocal of clamp(pos_normalizer, 1.0).
    inv_norm = (
        1.0 / jnp.maximum(jnp.asarray(pos_normalizer, dtype=jnp.float32), 1.0)
    ).reshape((1,))

    # Row tile sized to ~target_block_bytes per buffer (2 inputs + 1 output,
    # double-buffered -> ~6x that in VMEM), multiple of 8 sublanes unless we
    # take the whole (full-extent) row range.
    itemsize = jnp.dtype(x.dtype).itemsize
    br = max(1, target_block_bytes // max(1, cols * itemsize))
    br = min(br, rows)
    if br != rows:
        br = max(8, (br // 8) * 8)
    grid = (pl.cdiv(rows, br),)

    # index_map args: (grid_i, *scalar_prefetch_refs)
    blk = pl.BlockSpec((br, cols), lambda i, inv_ref: (i, 0))

    kernel = functools.partial(_qfl_kernel, beta=beta)

    cost = pl.CostEstimate(
        flops=10 * n,
        transcendentals=3 * n,
        bytes_accessed=3 * n * itemsize,
    )

    out = pl.pallas_call(
        kernel,
        out_shape=jax.ShapeDtypeStruct((rows, cols), x.dtype),
        grid_spec=pltpu.PrefetchScalarGridSpec(
            num_scalar_prefetch=1,
            grid=grid,
            in_specs=[blk, blk],
            out_specs=blk,
        ),
        compiler_params=pltpu.CompilerParams(
            dimension_semantics=("parallel",),
            # Working set is ~6 * br * cols * itemsize (a few MiB); explicit
            # limit keeps larger-than-default tiles safe even on v5e.
            vmem_limit_bytes=32 << 20,
        ),
        cost_estimate=cost,
    )(inv_norm, x2, t2)

    return out.reshape(orig_shape)


def _reference(x, target, pos_normalizer, beta=2.0):
    x = x.astype(jnp.float32)
    target = target.astype(jnp.float32)
    pred = jax.nn.sigmoid(x)
    scale = jnp.abs(pred - target) ** beta
    bce = jnp.maximum(x, 0.0) - x * target + jnp.log1p(jnp.exp(-jnp.abs(x)))
    return bce * scale / jnp.maximum(jnp.asarray(pos_normalizer, jnp.float32), 1.0)


if __name__ == "__main__":
    key = jax.random.PRNGKey(0)
    k1, k2, k3, k4 = jax.random.split(key, 4)

    # Shapes consistent with the module: input [B, M, C] logits,
    # target [B, M, C] already-sigmoided soft labels.
    B, M, C = 2, 256, 128
    x = jax.random.normal(k1, (B, M, C), dtype=jnp.float32) * 3.0
    target = jax.nn.sigmoid(jax.random.normal(k2, (B, M, C), dtype=jnp.float32))
    pos_normalizer = 0.5  # exercises the clamp(min=1.0) branch

    out = quality_focal_loss(x, target, pos_normalizer, beta=2.0)
    out = jax.block_until_ready(out)
    ref = _reference(x, target, pos_normalizer, beta=2.0)
    assert out.shape == (B, M, C)
    assert jnp.allclose(out, ref, atol=1e-5, rtol=1e-5), "mismatch vs reference"

    # Class dim not a multiple of 128 (e.g. 80 classes) -> lane-dense reshape path.
    B2, M2, C2 = 2, 64, 80
    x80 = jax.random.normal(k3, (B2, M2, C2), dtype=jnp.float32) * 3.0
    t80 = jax.nn.sigmoid(jax.random.normal(k4, (B2, M2, C2), dtype=jnp.float32))
    out80 = jax.block_until_ready(quality_focal_loss(x80, t80, 2.0, beta=2.0))
    ref80 = _reference(x80, t80, 2.0, beta=2.0)
    assert out80.shape == (B2, M2, C2)
    assert jnp.allclose(out80, ref80, atol=1e-5, rtol=1e-5), "C=80 mismatch"

    # bf16 input path (compute still f32 inside the kernel).
    out_bf16 = quality_focal_loss(
        x.astype(jnp.bfloat16), target.astype(jnp.bfloat16), 3.0, beta=2.0
    )
    out_bf16 = jax.block_until_ready(out_bf16)
    ref_bf16 = _reference(
        x.astype(jnp.bfloat16), target.astype(jnp.bfloat16), 3.0, beta=2.0
    )
    assert jnp.allclose(
        out_bf16.astype(jnp.float32), ref_bf16, atol=2e-2, rtol=2e-2
    ), "bf16 mismatch vs reference"

    print("KERNEL_OK")
</pallas_src>

<mosaic_0001>
module attributes {stable_mosaic.version = 11 : i64} {
  func.func @_qfl_kernel(%arg0: i32, %arg1: memref<1xf32, #tpu.memory_space<smem>>, %arg2: memref<512x128xf32, #tpu.memory_space<vmem>>, %arg3: memref<512x128xf32, #tpu.memory_space<vmem>>, %arg4: memref<512x128xf32, #tpu.memory_space<vmem>>) attributes {dimension_semantics = [#tpu.dimension_semantics<parallel>], iteration_bounds = array<i64: 1>, scalar_prefetch = 1 : i64, scratch_operands = 0 : i64, tpu.core_type = #tpu.core_type<tc>, window_params = [{transform_indices = @transform_0, window_bounds = array<i64: 512, 128>}, {transform_indices = @transform_1, window_bounds = array<i64: 512, 128>}, {transform_indices = @transform_2, window_bounds = array<i64: 512, 128>}]} {
    %c0 = arith.constant 0 : index
    %c0_0 = arith.constant 0 : index
    %0 = vector.load %arg2[%c0, %c0_0] : memref<512x128xf32, #tpu.memory_space<vmem>>, vector<512x128xf32>
    %c0_1 = arith.constant 0 : index
    %c0_2 = arith.constant 0 : index
    %1 = vector.load %arg3[%c0_1, %c0_2] : memref<512x128xf32, #tpu.memory_space<vmem>>, vector<512x128xf32>
    %2 = math.absf %0 : vector<512x128xf32>
    %cst = arith.constant 0.000000e+00 : f32
    %3 = vector.broadcast %cst : f32 to vector<512x128xf32>
    %4 = arith.subf %3, %2 : vector<512x128xf32>
    %5 = math.exp %4 : vector<512x128xf32>
    %cst_3 = arith.constant 1.000000e+00 : f32
    %6 = vector.broadcast %cst_3 : f32 to vector<512x128xf32>
    %7 = arith.addf %6, %5 : vector<512x128xf32>
    %cst_4 = arith.constant 1.000000e+00 : f32
    %8 = vector.broadcast %cst_4 : f32 to vector<512x128xf32>
    %9 = arith.divf %8, %7 : vector<512x128xf32>
    %cst_5 = arith.constant 0.000000e+00 : f32
    %10 = vector.broadcast %cst_5 : f32 to vector<512x128xf32>
    %11 = arith.cmpf oge, %0, %10 : vector<512x128xf32>
    %cst_6 = arith.constant 1.000000e+00 : f32
    %12 = vector.broadcast %cst_6 : f32 to vector<512x128xf32>
    %13 = arith.subf %12, %9 : vector<512x128xf32>
    %14 = arith.select %11, %9, %13 : vector<512x128xi1>, vector<512x128xf32>
    %cst_7 = arith.constant 0.000000e+00 : f32
    %15 = vector.broadcast %cst_7 : f32 to vector<512x128xf32>
    %16 = arith.maximumf %0, %15 : vector<512x128xf32>
    %17 = arith.mulf %0, %1 : vector<512x128xf32>
    %18 = arith.subf %16, %17 : vector<512x128xf32>
    %19 = math.log1p %5 : vector<512x128xf32>
    %20 = arith.addf %18, %19 : vector<512x128xf32>
    %21 = arith.subf %14, %1 : vector<512x128xf32>
    %22 = math.absf %21 : vector<512x128xf32>
    %23 = arith.mulf %22, %22 : vector<512x128xf32>
    %24 = arith.mulf %20, %23 : vector<512x128xf32>
    %c0_8 = arith.constant 0 : index
    %25 = memref.load %arg1[%c0_8] : memref<1xf32, #tpu.memory_space<smem>>
    %26 = vector.broadcast %25 : f32 to vector<512x128xf32>
    %27 = arith.mulf %24, %26 : vector<512x128xf32>
    %c0_9 = arith.constant 0 : index
    %c0_10 = arith.constant 0 : index
    %28 = vector.load %arg4[%c0_9, %c0_10] : memref<512x128xf32, #tpu.memory_space<vmem>>, vector<512x128xf32>
    tpu.vector_store %arg4[%c0_9, %c0_10], %27 {strides = array<i32>} : memref<512x128xf32, #tpu.memory_space<vmem>>, vector<512x128xf32>,
    return
  }
  func.func @transform_0(%arg0: i32, %arg1: memref<1xf32, #tpu.memory_space<smem>>) -> (i32, i32) {
    %c0_i32 = arith.constant 0 : i32
    %c0_i32_0 = arith.constant 0 : i32
    return %arg0, %c0_i32 : i32, i32
  }
  func.func @transform_1(%arg0: i32, %arg1: memref<1xf32, #tpu.memory_space<smem>>) -> (i32, i32) {
    %c0_i32 = arith.constant 0 : i32
    %c0_i32_0 = arith.constant 0 : i32
    return %arg0, %c0_i32 : i32, i32
  }
  func.func @transform_2(%arg0: i32, %arg1: memref<1xf32, #tpu.memory_space<smem>>) -> (i32, i32) {
    %c0_i32 = arith.constant 0 : i32
    %c0_i32_0 = arith.constant 0 : i32
    return %arg0, %c0_i32 : i32, i32
  }
}

</mosaic_0001>

<llo_original>
// kernel: tpu_custom_call.1
$region0: #{tpu_custom_call.1}
  #allocation0 [shape = 'u32[]', space=smem, size = 0x4, offset = 0x4, fixed_abs, tag = 'smem constant byte address 0x4 - core index']
  #allocation1 [shape = 'u32[144,128]{1,0:T(1,128)}', space=vmem, size = 0x12000, scoped, tag = 'internal scratch']
  #allocation2 [shape = 's32[1]{0}', space=sflag, size = 0x4, scoped, tag = 'scoped memory for tpu_custom_call.1']
  #allocation3 [shape = 'f32[1]{0:T(128)S(6)}', space=smem, size = 0x200, scoped, tag = 'prefetched SMEM operand 0']
  %s0 = inlined_call_operand.<no memory space> [shape: f32[1], index: 0, kind: input, shape index: {}]
  %s1 = inlined_call_operand.hbm [shape: f32[512,128], index: 1, kind: input, shape index: {}]
  %s2 = inlined_call_operand.hbm [shape: f32[512,128], index: 2, kind: input, shape index: {}]
  %s3 = inlined_call_operand.hbm [shape: f32[512,128], index: 3, kind: output, shape index: {}]
  %s4 = sld [smem:[#allocation0]]
  $region26: #{tpu_custom_call.1} parent=0
    _
  %s6 = ssub.s32 1, %s4
  %s7 = scalar_select 0, %s6, %s4
  %8 = sst [smem:[#allocation3]] %s0
  $region1: #{tpu_custom_call.1} parent=0
    #allocation4 [shape = 'u8[262144]{0}', space=vmem, size = 0x40000, scoped, tag = 'input window, operand 1, single buffered']
    #allocation5 [shape = 's32[1]{0}', space=sflag, size = 0x4, scoped, tag = 'scoped memory for tpu_custom_call.1']
    #allocation6 [shape = 's32[1]{0}', space=sflag, size = 0x4, scoped, tag = 'scoped memory for tpu_custom_call.1']
    #allocation7 [shape = 'u8[262144]{0}', space=vmem, size = 0x40000, scoped, tag = 'input window, operand 2, single buffered']
    #allocation8 [shape = 's32[1]{0}', space=sflag, size = 0x4, scoped, tag = 'scoped memory for tpu_custom_call.1']
    #allocation9 [shape = 'u8[262144]{0}', space=vmem, size = 0x40000, scoped, tag = 'output window, operand 0, single buffered']
    %9 = vsyncpa [#allocation5], 0
    %10 = vsyncpa [#allocation8], 0
    %11 = vsyncpa [#allocation6], 0
    // Predicated region
    $region2: #{tpu_custom_call.1} parent=1 // pred_check
      _
    $region3: #{tpu_custom_call.1} parent=1 // pred_check_branch
      %13 = sbr.rel (0) target = $region5
    $region4: #{tpu_custom_call.1} parent=1 // pred_region
      %s15 = ssub.s32 8192, 8192
      %16 = vsyncadd [#allocation5], %s15
      %s17 = sshll.u32 [#allocation4], 4
      %s18 = int_to_ptr.vmem [resolvable:$true] %s17
      %23 = dma.hbm_to_vmem [thread:$0]  %s1, 8192, %s18, [#allocation5], 128, 128, 8
    $region5: #{tpu_custom_call.1} parent=1 // pred_fallthru
      _
    // Predicated region
    $region6: #{tpu_custom_call.1} parent=1 // pred_check
      _
    $region7: #{tpu_custom_call.1} parent=1 // pred_check_branch
      %25 = sbr.rel (0) target = $region9
    $region8: #{tpu_custom_call.1} parent=1 // pred_region
      %s27 = ssub.s32 8192, 8192
      %28 = vsyncadd [#allocation8], %s27
      %s29 = sshll.u32 [#allocation7], 4
      %s30 = int_to_ptr.vmem [resolvable:$true] %s29
      %35 = dma.hbm_to_vmem [thread:$0]  %s2, 8192, %s30, [#allocation8], 128, 128, 8
    $region9: #{tpu_custom_call.1} parent=1 // pred_fallthru
      _
    // Predicated region
    $region10: #{tpu_custom_call.1} parent=1 // pred_check
      _
    $region11: #{tpu_custom_call.1} parent=1 // pred_check_branch
      %37 = sbr.rel (0) target = $region13
    $region12: #{tpu_custom_call.1} parent=1 // pred_region
      %38 = dma.done [#allocation5], 8192
    $region13: #{tpu_custom_call.1} parent=1 // pred_fallthru
      _
    // Predicated region
    $region14: #{tpu_custom_call.1} parent=1 // pred_check
      _
    $region15: #{tpu_custom_call.1} parent=1 // pred_check_branch
      %40 = sbr.rel (0) target = $region17
    $region16: #{tpu_custom_call.1} parent=1 // pred_region
      %41 = dma.done [#allocation8], 8192
    $region17: #{tpu_custom_call.1} parent=1 // pred_fallthru
      _
    %v42 = vld [vmem:[#allocation4] sm:$0xff]
    %v43 = vld [vmem:[#allocation4 + $0x8] sm:$0xff]
    %v44 = vld [vmem:[#allocation4 + $0x10] sm:$0xff]
    %v45 = vld [vmem:[#allocation4 + $0x18] sm:$0xff]
    %v46 = vld [vmem:[#allocation4 + $0x20] sm:$0xff]
    %v47 = vld [vmem:[#allocation4 + $0x28] sm:$0xff]
    %v48 = vld [vmem:[#allocation4 + $0x30] sm:$0xff]
    %v49 = vld [vmem:[#allocation4 + $0x38] sm:$0xff]
    %v50 = vld [vmem:[#allocation4 + $0x40] sm:$0xff]
    %v51 = vld [vmem:[#allocation4 + $0x48] sm:$0xff]
    %v52 = vld [vmem:[#allocation4 + $0x50] sm:$0xff]
    %v53 = vld [vmem:[#allocation4 + $0x58] sm:$0xff]
    %v54 = vld [vmem:[#allocation4 + $0x60] sm:$0xff]
    %v55 = vld [vmem:[#allocation4 + $0x68] sm:$0xff]
    %v56 = vld [vmem:[#allocation4 + $0x70] sm:$0xff]
    %v57 = vld [vmem:[#allocation4 + $0x78] sm:$0xff]
    %v58 = vld [vmem:[#allocation4 + $0x80] sm:$0xff]
    %v59 = vld [vmem:[#allocation4 + $0x88] sm:$0xff]
    %v60 = vld [vmem:[#allocation4 + $0x90] sm:$0xff]
    %v61 = vld [vmem:[#allocation4 + $0x98] sm:$0xff]
    %v62 = vld [vmem:[#allocation4 + $0xa0] sm:$0xff]
    %v63 = vld [vmem:[#allocation4 + $0xa8] sm:$0xff]
    %v64 = vld [vmem:[#allocation4 + $0xb0] sm:$0xff]
    %v65 = vld [vmem:[#allocation4 + $0xb8] sm:$0xff]
    %v66 = vld [vmem:[#allocation4 + $0xc0] sm:$0xff]
    %v67 = vld [vmem:[#allocation4 + $0xc8] sm:$0xff]
    %v68 = vld [vmem:[#allocation4 + $0xd0] sm:$0xff]
    %v69 = vld [vmem:[#allocation4 + $0xd8] sm:$0xff]
    %v70 = vld [vmem:[#allocation4 + $0xe0] sm:$0xff]
    %v71 = vld [vmem:[#allocation4 + $0xe8] sm:$0xff]
    %v72 = vld [vmem:[#allocation4 + $0xf0] sm:$0xff]
    %v73 = vld [vmem:[#allocation4 + $0xf8] sm:$0xff]
    %v74 = vld [vmem:[#allocation4 + $0x100] sm:$0xff]
    %v75 = vld [vmem:[#allocation4 + $0x108] sm:$0xff]
    %v76 = vld [vmem:[#allocation4 + $0x110] sm:$0xff]
    %v77 = vld [vmem:[#allocation4 + $0x118] sm:$0xff]
    %v78 = vld [vmem:[#allocation4 + $0x120] sm:$0xff]
    %v79 = vld [vmem:[#allocation4 + $0x128] sm:$0xff]
    %v80 = vld [vmem:[#allocation4 + $0x130] sm:$0xff]
    %v81 = vld [vmem:[#allocation4 + $0x138] sm:$0xff]
    %v82 = vld [vmem:[#allocation4 + $0x140] sm:$0xff]
    %v83 = vld [vmem:[#allocation4 + $0x148] sm:$0xff]
    %v84 = vld [vmem:[#allocation4 + $0x150] sm:$0xff]
    %v85 = vld [vmem:[#allocation4 + $0x158] sm:$0xff]
    %v86 = vld [vmem:[#allocation4 + $0x160] sm:$0xff]
    %v87 = vld [vmem:[#allocation4 + $0x168] sm:$0xff]
    %v88 = vld [vmem:[#allocation4 + $0x170] sm:$0xff]
    %v89 = vld [vmem:[#allocation4 + $0x178] sm:$0xff]
    %v90 = vld [vmem:[#allocation4 + $0x180] sm:$0xff]
    %v91 = vld [vmem:[#allocation4 + $0x188] sm:$0xff]
    %v92 = vld [vmem:[#allocation4 + $0x190] sm:$0xff]
    %v93 = vld [vmem:[#allocation4 + $0x198] sm:$0xff]
    %v94 = vld [vmem:[#allocation4 + $0x1a0] sm:$0xff]
    %v95 = vld [vmem:[#allocation4 + $0x1a8] sm:$0xff]
    %v96 = vld [vmem:[#allocation4 + $0x1b0] sm:$0xff]
    %v97 = vld [vmem:[#allocation4 + $0x1b8] sm:$0xff]
    %v98 = vld [vmem:[#allocation4 + $0x1c0] sm:$0xff]
    %v99 = vld [vmem:[#allocation4 + $0x1c8] sm:$0xff]
    %v100 = vld [vmem:[#allocation4 + $0x1d0] sm:$0xff]
    %v101 = vld [vmem:[#allocation4 + $0x1d8] sm:$0xff]
    %v102 = vld [vmem:[#allocation4 + $0x1e0] sm:$0xff]
    %v103 = vld [vmem:[#allocation4 + $0x1e8] sm:$0xff]
    %v104 = vld [vmem:[#allocation4 + $0x1f0] sm:$0xff]
    %v105 = vld [vmem:[#allocation4 + $0x1f8] sm:$0xff]
    %v106 = vld [vmem:[#allocation7] sm:$0xff]
    %v107 = vld [vmem:[#allocation7 + $0x8] sm:$0xff]
    %v108 = vld [vmem:[#allocation7 + $0x10] sm:$0xff]
    %v109 = vld [vmem:[#allocation7 + $0x18] sm:$0xff]
    %v110 = vld [vmem:[#allocation7 + $0x20] sm:$0xff]
    %v111 = vld [vmem:[#allocation7 + $0x28] sm:$0xff]
    %v112 = vld [vmem:[#allocation7 + $0x30] sm:$0xff]
    %v113 = vld [vmem:[#allocation7 + $0x38] sm:$0xff]
    %v114 = vld [vmem:[#allocation7 + $0x40] sm:$0xff]
    %v115 = vld [vmem:[#allocation7 + $0x48] sm:$0xff]
    %v116 = vld [vmem:[#allocation7 + $0x50] sm:$0xff]
    %v117 = vld [vmem:[#allocation7 + $0x58] sm:$0xff]
    %v118 = vld [vmem:[#allocation7 + $0x60] sm:$0xff]
    %v119 = vld [vmem:[#allocation7 + $0x68] sm:$0xff]
    %v120 = vld [vmem:[#allocation7 + $0x70] sm:$0xff]
    %v121 = vld [vmem:[#allocation7 + $0x78] sm:$0xff]
    %v122 = vld [vmem:[#allocation7 + $0x80] sm:$0xff]
    %v123 = vld [vmem:[#allocation7 + $0x88] sm:$0xff]
    %v124 = vld [vmem:[#allocation7 + $0x90] sm:$0xff]
    %v125 = vld [vmem:[#allocation7 + $0x98] sm:$0xff]
    %v126 = vld [vmem:[#allocation7 + $0xa0] sm:$0xff]
    %v127 = vld [vmem:[#allocation7 + $0xa8] sm:$0xff]
    %v128 = vld [vmem:[#allocation7 + $0xb0] sm:$0xff]
    %v129 = vld [vmem:[#allocation7 + $0xb8] sm:$0xff]
    %v130 = vld [vmem:[#allocation7 + $0xc0] sm:$0xff]
    %v131 = vld [vmem:[#allocation7 + $0xc8] sm:$0xff]
    %v132 = vld [vmem:[#allocation7 + $0xd0] sm:$0xff]
    %v133 = vld [vmem:[#allocation7 + $0xd8] sm:$0xff]
    %v134 = vld [vmem:[#allocation7 + $0xe0] sm:$0xff]
    %v135 = vld [vmem:[#allocation7 + $0xe8] sm:$0xff]
    %v136 = vld [vmem:[#allocation7 + $0xf0] sm:$0xff]
    %v137 = vld [vmem:[#allocation7 + $0xf8] sm:$0xff]
    %v138 = vld [vmem:[#allocation7 + $0x100] sm:$0xff]
    %v139 = vld [vmem:[#allocation7 + $0x108] sm:$0xff]
    %v140 = vld [vmem:[#allocation7 + $0x110] sm:$0xff]
    %v141 = vld [vmem:[#allocation7 + $0x118] sm:$0xff]
    %v142 = vld [vmem:[#allocation7 + $0x120] sm:$0xff]
    %v143 = vld [vmem:[#allocation7 + $0x128] sm:$0xff]
    %v144 = vld [vmem:[#allocation7 + $0x130] sm:$0xff]
    %v145 = vld [vmem:[#allocation7 + $0x138] sm:$0xff]
    %v146 = vld [vmem:[#allocation7 + $0x140] sm:$0xff]
    %v147 = vld [vmem:[#allocation7 + $0x148] sm:$0xff]
    %v148 = vld [vmem:[#allocation7 + $0x150] sm:$0xff]
    %v149 = vld [vmem:[#allocation7 + $0x158] sm:$0xff]
    %v150 = vld [vmem:[#allocation7 + $0x160] sm:$0xff]
    %v151 = vld [vmem:[#allocation7 + $0x168] sm:$0xff]
    %v152 = vld [vmem:[#allocation7 + $0x170] sm:$0xff]
    %v153 = vld [vmem:[#allocation7 + $0x178] sm:$0xff]
    %v154 = vld [vmem:[#allocation7 + $0x180] sm:$0xff]
    %v155 = vld [vmem:[#allocation7 + $0x188] sm:$0xff]
    %v156 = vld [vmem:[#allocation7 + $0x190] sm:$0xff]
    %v157 = vld [vmem:[#allocation7 + $0x198] sm:$0xff]
    %v158 = vld [vmem:[#allocation7 + $0x1a0] sm:$0xff]
    %v159 = vld [vmem:[#allocation7 + $0x1a8] sm:$0xff]
    %v160 = vld [vmem:[#allocation7 + $0x1b0] sm:$0xff]
    %v161 = vld [vmem:[#allocation7 + $0x1b8] sm:$0xff]
    %v162 = vld [vmem:[#allocation7 + $0x1c0] sm:$0xff]
    %v163 = vld [vmem:[#allocation7 + $0x1c8] sm:$0xff]
    %v164 = vld [vmem:[#allocation7 + $0x1d0] sm:$0xff]
    %v165 = vld [vmem:[#allocation7 + $0x1d8] sm:$0xff]
    %v166 = vld [vmem:[#allocation7 + $0x1e0] sm:$0xff]
    %v167 = vld [vmem:[#allocation7 + $0x1e8] sm:$0xff]
    %v168 = vld [vmem:[#allocation7 + $0x1f0] sm:$0xff]
    %v169 = vld [vmem:[#allocation7 + $0x1f8] sm:$0xff]
    %v170 = vand.u32 2147483647, %v42
    %v171 = vand.u32 2147483647, %v43
    %v172 = vand.u32 2147483647, %v44
    %v173 = vand.u32 2147483647, %v45
    %v174 = vand.u32 2147483647, %v46
    %v175 = vand.u32 2147483647, %v47
    %v176 = vand.u32 2147483647, %v48
    %v177 = vand.u32 2147483647, %v49
    %v178 = vand.u32 2147483647, %v50
    %v179 = vand.u32 2147483647, %v51
    %v180 = vand.u32 2147483647, %v52
    %v181 = vand.u32 2147483647, %v53
    %v182 = vand.u32 2147483647, %v54
    %v183 = vand.u32 2147483647, %v55
    %v184 = vand.u32 2147483647, %v56
    %v185 = vand.u32 2147483647, %v57
    %v186 = vand.u32 2147483647, %v58
    %v187 = vand.u32 2147483647, %v59
    %v188 = vand.u32 2147483647, %v60
    %v189 = vand.u32 2147483647, %v61
    %v190 = vand.u32 2147483647, %v62
    %v191 = vand.u32 2147483647, %v63
    %v192 = vand.u32 2147483647, %v64
    %v193 = vand.u32 2147483647, %v65
    %v194 = vand.u32 2147483647, %v66
    %v195 = vand.u32 2147483647, %v67
    %v196 = vand.u32 2147483647, %v68
    %v197 = vand.u32 2147483647, %v69
    %v198 = vand.u32 2147483647, %v70
    %v199 = vand.u32 2147483647, %v71
    %v200 = vand.u32 2147483647, %v72
    %v201 = vand.u32 2147483647, %v73
    %v202 = vand.u32 2147483647, %v74
    %v203 = vand.u32 2147483647, %v75
    %v204 = vand.u32 2147483647, %v76
    %v205 = vand.u32 2147483647, %v77
    %v206 = vand.u32 2147483647, %v78
    %v207 = vand.u32 2147483647, %v79
    %v208 = vand.u32 2147483647, %v80
    %v209 = vand.u32 2147483647, %v81
    %v210 = vand.u32 2147483647, %v82
    %v211 = vand.u32 2147483647, %v83
    %v212 = vand.u32 2147483647, %v84
    %v213 = vand.u32 2147483647, %v85
    %v214 = vand.u32 2147483647, %v86
    %v215 = vand.u32 2147483647, %v87
    %v216 = vand.u32 2147483647, %v88
    %v217 = vand.u32 2147483647, %v89
    %v218 = vand.u32 2147483647, %v90
    %v219 = vand.u32 2147483647, %v91
    %v220 = vand.u32 2147483647, %v92
    %v221 = vand.u32 2147483647, %v93
    %v222 = vand.u32 2147483647, %v94
    %v223 = vand.u32 2147483647, %v95
    %v224 = vand.u32 2147483647, %v96
    %v225 = vand.u32 2147483647, %v97
    %v226 = vand.u32 2147483647, %v98
    %v227 = vand.u32 2147483647, %v99
    %v228 = vand.u32 2147483647, %v100
    %v229 = vand.u32 2147483647, %v101
    %v230 = vand.u32 2147483647, %v102
    %v231 = vand.u32 2147483647, %v103
    %v232 = vand.u32 2147483647, %v104
    %v233 = vand.u32 2147483647, %v105
    %v234 = vsub.f32 0.0, %v170
    %v235 = vsub.f32 0.0, %v171
    %v236 = vsub.f32 0.0, %v172
    %v237 = vsub.f32 0.0, %v173
    %v238 = vsub.f32 0.0, %v174
    %v239 = vsub.f32 0.0, %v175
    %v240 = vsub.f32 0.0, %v176
    %v241 = vsub.f32 0.0, %v177
    %v242 = vsub.f32 0.0, %v178
    %v243 = vsub.f32 0.0, %v179
    %v244 = vsub.f32 0.0, %v180
    %v245 = vsub.f32 0.0, %v181
    %v246 = vsub.f32 0.0, %v182
    %v247 = vsub.f32 0.0, %v183
    %v248 = vsub.f32 0.0, %v184
    %v249 = vsub.f32 0.0, %v185
    %v250 = vsub.f32 0.0, %v186
    %v251 = vsub.f32 0.0, %v187
    %v252 = vsub.f32 0.0, %v188
    %v253 = vsub.f32 0.0, %v189
    %v254 = vsub.f32 0.0, %v190
    %v255 = vsub.f32 0.0, %v191
    %v256 = vsub.f32 0.0, %v192
    %v257 = vsub.f32 0.0, %v193
    %v258 = vsub.f32 0.0, %v194
    %v259 = vsub.f32 0.0, %v195
    %v260 = vsub.f32 0.0, %v196
    %v261 = vsub.f32 0.0, %v197
    %v262 = vsub.f32 0.0, %v198
    %v263 = vsub.f32 0.0, %v199
    %v264 = vsub.f32 0.0, %v200
    %v265 = vsub.f32 0.0, %v201
    %v266 = vsub.f32 0.0, %v202
    %v267 = vsub.f32 0.0, %v203
    %v268 = vsub.f32 0.0, %v204
    %v269 = vsub.f32 0.0, %v205
    %v270 = vsub.f32 0.0, %v206
    %v271 = vsub.f32 0.0, %v207
    %v272 = vsub.f32 0.0, %v208
    %v273 = vsub.f32 0.0, %v209
    %v274 = vsub.f32 0.0, %v210
    %v275 = vsub.f32 0.0, %v211
    %v276 = vsub.f32 0.0, %v212
    %v277 = vsub.f32 0.0, %v213
    %v278 = vsub.f32 0.0, %v214
    %v279 = vsub.f32 0.0, %v215
    %v280 = vsub.f32 0.0, %v216
    %v281 = vsub.f32 0.0, %v217
    %v282 = vsub.f32 0.0, %v218
    %v283 = vsub.f32 0.0, %v219
    %v284 = vsub.f32 0.0, %v220
    %v285 = vsub.f32 0.0, %v221
    %v286 = vsub.f32 0.0, %v222
    %v287 = vsub.f32 0.0, %v223
    %v288 = vsub.f32 0.0, %v224
    %v289 = vsub.f32 0.0, %v225
    %v290 = vsub.f32 0.0, %v226
    %v291 = vsub.f32 0.0, %v227
    %v292 = vsub.f32 0.0, %v228
    %v293 = vsub.f32 0.0, %v229
    %v294 = vsub.f32 0.0, %v230
    %v295 = vsub.f32 0.0, %v231
    %v296 = vsub.f32 0.0, %v232
    %v297 = vsub.f32 0.0, %v233
    %v298 = vmul.f32 %v234, 1.442695
    %v299 = vpow.pop %v298
    %v300 = vmul.f32 %v235, 1.442695
    %v301 = vpow.pop %v300
    %v302 = vmul.f32 %v236, 1.442695
    %v303 = vpow.pop %v302
    %v304 = vmul.f32 %v237, 1.442695
    %v305 = vpow.pop %v304
    %v306 = vmul.f32 %v238, 1.442695
    %v307 = vpow.pop %v306
    %v308 = vmul.f32 %v239, 1.442695
    %v309 = vpow.pop %v308
    %v310 = vmul.f32 %v240, 1.442695
    %v311 = vpow.pop %v310
    %v312 = vmul.f32 %v241, 1.442695
    %v313 = vpow.pop %v312
    %v314 = vmul.f32 %v242, 1.442695
    %v315 = vpow.pop %v314
    %v316 = vmul.f32 %v243, 1.442695
    %v317 = vpow.pop %v316
    %v318 = vmul.f32 %v244, 1.442695
    %v319 = vpow.pop %v318
    %v320 = vmul.f32 %v245, 1.442695
    %v321 = vpow.pop %v320
    %v322 = vmul.f32 %v246, 1.442695
    %v323 = vpow.pop %v322
    %v324 = vmul.f32 %v247, 1.442695
    %v325 = vpow.pop %v324
    %v326 = vmul.f32 %v248, 1.442695
    %v327 = vpow.pop %v326
    %v328 = vmul.f32 %v249, 1.442695
    %v329 = vpow.pop %v328
    %v330 = vmul.f32 %v250, 1.442695
    %v331 = vpow.pop %v330
    %v332 = vmul.f32 %v251, 1.442695
    %v333 = vpow.pop %v332
    %v334 = vmul.f32 %v252, 1.442695
    %v335 = vpow.pop %v334
    %v336 = vmul.f32 %v253, 1.442695
    %v337 = vpow.pop %v336
    %v338 = vmul.f32 %v254, 1.442695
    %v339 = vpow.pop %v338
    %v340 = vmul.f32 %v255, 1.442695
    %v341 = vpow.pop %v340
    %v342 = vmul.f32 %v256, 1.442695
    %v343 = vpow.pop %v342
    %v344 = vmul.f32 %v257, 1.442695
    %v345 = vpow.pop %v344
    %v346 = vmul.f32 %v258, 1.442695
    %v347 = vpow.pop %v346
    %v348 = vmul.f32 %v259, 1.442695
    %v349 = vpow.pop %v348
    %v350 = vmul.f32 %v260, 1.442695
    %v351 = vpow.pop %v350
    %v352 = vmul.f32 %v261, 1.442695
    %v353 = vpow.pop %v352
    %v354 = vmul.f32 %v262, 1.442695
    %v355 = vpow.pop %v354
    %v356 = vmul.f32 %v263, 1.442695
    %v357 = vpow.pop %v356
    %v358 = vmul.f32 %v264, 1.442695
    %v359 = vpow.pop %v358
    %v360 = vmul.f32 %v265, 1.442695
    %v361 = vpow.pop %v360
    %v362 = vmul.f32 %v266, 1.442695
    %v363 = vpow.pop %v362
    %v364 = vmul.f32 %v267, 1.442695
    %v365 = vpow.pop %v364
    %v366 = vmul.f32 %v268, 1.442695
    %v367 = vpow.pop %v366
    %v368 = vmul.f32 %v269, 1.442695
    %v369 = vpow.pop %v368
    %v370 = vmul.f32 %v270, 1.442695
    %v371 = vpow.pop %v370
    %v372 = vmul.f32 %v271, 1.442695
    %v373 = vpow.pop %v372
    %v374 = vmul.f32 %v272, 1.442695
    %v375 = vpow.pop %v374
    %v376 = vmul.f32 %v273, 1.442695
    %v377 = vpow.pop %v376
    %v378 = vmul.f32 %v274, 1.442695
    %v379 = vpow.pop %v378
    %v380 = vmul.f32 %v275, 1.442695
    %v381 = vpow.pop %v380
    %v382 = vmul.f32 %v276, 1.442695
    %v383 = vpow.pop %v382
    %v384 = vmul.f32 %v277, 1.442695
    %v385 = vpow.pop %v384
    %v386 = vmul.f32 %v278, 1.442695
    %v387 = vpow.pop %v386
    %v388 = vmul.f32 %v279, 1.442695
    %v389 = vpow.pop %v388
    %v390 = vmul.f32 %v280, 1.442695
    %v391 = vpow.pop %v390
    %v392 = vmul.f32 %v281, 1.442695
    %v393 = vpow.pop %v392
    %v394 = vmul.f32 %v282, 1.442695
    %v395 = vpow.pop %v394
    %v396 = vmul.f32 %v283, 1.442695
    %v397 = vpow.pop %v396
    %v398 = vmul.f32 %v284, 1.442695
    %v399 = vpow.pop %v398
    %v400 = vmul.f32 %v285, 1.442695
    %v401 = vpow.pop %v400
    %v402 = vmul.f32 %v286, 1.442695
    %v403 = vpow.pop %v402
    %v404 = vmul.f32 %v287, 1.442695
    %v405 = vpow.pop %v404
    %v406 = vmul.f32 %v288, 1.442695
    %v407 = vpow.pop %v406
    %v408 = vmul.f32 %v289, 1.442695
    %v409 = vpow.pop %v408
    %v410 = vmul.f32 %v290, 1.442695
    %v411 = vpow.pop %v410
    %v412 = vmul.f32 %v291, 1.442695
    %v413 = vpow.pop %v412
    %v414 = vmul.f32 %v292, 1.442695
    %v415 = vpow.pop %v414
    %v416 = vmul.f32 %v293, 1.442695
    %v417 = vpow.pop %v416
    %v418 = vmul.f32 %v294, 1.442695
    %v419 = vpow.pop %v418
    %v420 = vmul.f32 %v295, 1.442695
    %v421 = vpow.pop %v420
    %v422 = vmul.f32 %v296, 1.442695
    %v423 = vpow.pop %v422
    %v424 = vmul.f32 %v297, 1.442695
    %v425 = vpow.pop %v424
    %v426 = vadd.f32 %v299, 1.0
    %v427 = vadd.f32 %v301, 1.0
    %v428 = vadd.f32 %v303, 1.0
    %v429 = vadd.f32 %v305, 1.0
    %v430 = vadd.f32 %v307, 1.0
    %v431 = vadd.f32 %v309, 1.0
    %v432 = vadd.f32 %v311, 1.0
    %v433 = vadd.f32 %v313, 1.0
    %v434 = vadd.f32 %v315, 1.0
    %v435 = vadd.f32 %v317, 1.0
    %v436 = vadd.f32 %v319, 1.0
    %v437 = vadd.f32 %v321, 1.0
    %v438 = vadd.f32 %v323, 1.0
    %v439 = vadd.f32 %v325, 1.0
    %v440 = vadd.f32 %v327, 1.0
    %v441 = vadd.f32 %v329, 1.0
    %v442 = vadd.f32 %v331, 1.0
    %v443 = vadd.f32 %v333, 1.0
    %v444 = vadd.f32 %v335, 1.0
    %v445 = vadd.f32 %v337, 1.0
    %v446 = vadd.f32 %v339, 1.0
    %v447 = vadd.f32 %v341, 1.0
    %v448 = vadd.f32 %v343, 1.0
    %v449 = vadd.f32 %v345, 1.0
    %v450 = vadd.f32 %v347, 1.0
    %v451 = vadd.f32 %v349, 1.0
    %v452 = vadd.f32 %v351, 1.0
    %v453 = vadd.f32 %v353, 1.0
    %v454 = vadd.f32 %v355, 1.0
    %v455 = vadd.f32 %v357, 1.0
    %v456 = vadd.f32 %v359, 1.0
    %v457 = vadd.f32 %v361, 1.0
    %v458 = vadd.f32 %v363, 1.0
    %v459 = vadd.f32 %v365, 1.0
    %v460 = vadd.f32 %v367, 1.0
    %v461 = vadd.f32 %v369, 1.0
    %v462 = vadd.f32 %v371, 1.0
    %v463 = vadd.f32 %v373, 1.0
    %v464 = vadd.f32 %v375, 1.0
    %v465 = vadd.f32 %v377, 1.0
    %v466 = vadd.f32 %v379, 1.0
    %v467 = vadd.f32 %v381, 1.0
    %v468 = vadd.f32 %v383, 1.0
    %v469 = vadd.f32 %v385, 1.0
    %v470 = vadd.f32 %v387, 1.0
    %v471 = vadd.f32 %v389, 1.0
    %v472 = vadd.f32 %v391, 1.0
    %v473 = vadd.f32 %v393, 1.0
    %v474 = vadd.f32 %v395, 1.0
    %v475 = vadd.f32 %v397, 1.0
    %v476 = vadd.f32 %v399, 1.0
    %v477 = vadd.f32 %v401, 1.0
    %v478 = vadd.f32 %v403, 1.0
    %v479 = vadd.f32 %v405, 1.0
    %v480 = vadd.f32 %v407, 1.0
    %v481 = vadd.f32 %v409, 1.0
    %v482 = vadd.f32 %v411, 1.0
    %v483 = vadd.f32 %v413, 1.0
    %v484 = vadd.f32 %v415, 1.0
    %v485 = vadd.f32 %v417, 1.0
    %v486 = vadd.f32 %v419, 1.0
    %v487 = vadd.f32 %v421, 1.0
    %v488 = vadd.f32 %v423, 1.0
    %v489 = vadd.f32 %v425, 1.0
    %v490 = vrcp.pop %v426
    %v491 = vmul.f32 1.0, %v490
    %v492 = vrcp.pop %v427
    %v493 = vmul.f32 1.0, %v492
    %v494 = vrcp.pop %v428
    %v495 = vmul.f32 1.0, %v494
    %v496 = vrcp.pop %v429
    %v497 = vmul.f32 1.0, %v496
    %v498 = vrcp.pop %v430
    %v499 = vmul.f32 1.0, %v498
    %v500 = vrcp.pop %v431
    %v501 = vmul.f32 1.0, %v500
    %v502 = vrcp.pop %v432
    %v503 = vmul.f32 1.0, %v502
    %v504 = vrcp.pop %v433
    %v505 = vmul.f32 1.0, %v504
    %v506 = vrcp.pop %v434
    %v507 = vmul.f32 1.0, %v506
    %v508 = vrcp.pop %v435
    %v509 = vmul.f32 1.0, %v508
    %v510 = vrcp.pop %v436
    %v511 = vmul.f32 1.0, %v510
    %v512 = vrcp.pop %v437
    %v513 = vmul.f32 1.0, %v512
    %v514 = vrcp.pop %v438
    %v515 = vmul.f32 1.0, %v514
    %v516 = vrcp.pop %v439
    %v517 = vmul.f32 1.0, %v516
    %v518 = vrcp.pop %v440
    %v519 = vmul.f32 1.0, %v518
    %v520 = vrcp.pop %v441
    %v521 = vmul.f32 1.0, %v520
    %v522 = vrcp.pop %v442
    %v523 = vmul.f32 1.0, %v522
    %v524 = vrcp.pop %v443
    %v525 = vmul.f32 1.0, %v524
    %v526 = vrcp.pop %v444
    %v527 = vmul.f32 1.0, %v526
    %v528 = vrcp.pop %v445
    %v529 = vmul.f32 1.0, %v528
    %v530 = vrcp.pop %v446
    %v531 = vmul.f32 1.0, %v530
    %v532 = vrcp.pop %v447
    %v533 = vmul.f32 1.0, %v532
    %v534 = vrcp.pop %v448
    %v535 = vmul.f32 1.0, %v534
    %v536 = vrcp.pop %v449
    %v537 = vmul.f32 1.0, %v536
    %v538 = vrcp.pop %v450
    %v539 = vmul.f32 1.0, %v538
    %v540 = vrcp.pop %v451
    %v541 = vmul.f32 1.0, %v540
    %v542 = vrcp.pop %v452
    %v543 = vmul.f32 1.0, %v542
    %v544 = vrcp.pop %v453
    %v545 = vmul.f32 1.0, %v544
    %v546 = vrcp.pop %v454
    %v547 = vmul.f32 1.0, %v546
    %v548 = vrcp.pop %v455
    %v549 = vmul.f32 1.0, %v548
    %v550 = vrcp.pop %v456
    %v551 = vmul.f32 1.0, %v550
    %v552 = vrcp.pop %v457
    %v553 = vmul.f32 1.0, %v552
    %v554 = vrcp.pop %v458
    %v555 = vmul.f32 1.0, %v554
    %v556 = vrcp.pop %v459
    %v557 = vmul.f32 1.0, %v556
    %v558 = vrcp.pop %v460
    %v559 = vmul.f32 1.0, %v558
    %v560 = vrcp.pop %v461
    %v561 = vmul.f32 1.0, %v560
    %v562 = vrcp.pop %v462
    %v563 = vmul.f32 1.0, %v562
    %v564 = vrcp.pop %v463
    %v565 = vmul.f32 1.0, %v564
    %v566 = vrcp.pop %v464
    %v567 = vmul.f32 1.0, %v566
    %v568 = vrcp.pop %v465
    %v569 = vmul.f32 1.0, %v568
    %v570 = vrcp.pop %v466
    %v571 = vmul.f32 1.0, %v570
    %v572 = vrcp.pop %v467
    %v573 = vmul.f32 1.0, %v572
    %v574 = vrcp.pop %v468
    %v575 = vmul.f32 1.0, %v574
    %v576 = vrcp.pop %v469
    %v577 = vmul.f32 1.0, %v576
    %v578 = vrcp.pop %v470
    %v579 = vmul.f32 1.0, %v578
    %v580 = vrcp.pop %v471
    %v581 = vmul.f32 1.0, %v580
    %v582 = vrcp.pop %v472
    %v583 = vmul.f32 1.0, %v582
    %v584 = vrcp.pop %v473
    %v585 = vmul.f32 1.0, %v584
    %v586 = vrcp.pop %v474
    %v587 = vmul.f32 1.0, %v586
    %v588 = vrcp.pop %v475
    %v589 = vmul.f32 1.0, %v588
    %v590 = vrcp.pop %v476
    %v591 = vmul.f32 1.0, %v590
    %v592 = vrcp.pop %v477
    %v593 = vmul.f32 1.0, %v592
    %v594 = vrcp.pop %v478
    %v595 = vmul.f32 1.0, %v594
    %v596 = vrcp.pop %v479
    %v597 = vmul.f32 1.0, %v596
    %v598 = vrcp.pop %v480
    %v599 = vmul.f32 1.0, %v598
    %v600 = vrcp.pop %v481
    %v601 = vmul.f32 1.0, %v600
    %v602 = vrcp.pop %v482
    %v603 = vmul.f32 1.0, %v602
    %v604 = vrcp.pop %v483
    %v605 = vmul.f32 1.0, %v604
    %v606 = vrcp.pop %v484
    %v607 = vmul.f32 1.0, %v606
    %v608 = vrcp.pop %v485
    %v609 = vmul.f32 1.0, %v608
    %v610 = vrcp.pop %v486
    %v611 = vmul.f32 1.0, %v610
    %v612 = vrcp.pop %v487
    %v613 = vmul.f32 1.0, %v612
    %v614 = vrcp.pop %v488
    %v615 = vmul.f32 1.0, %v614
    %v616 = vrcp.pop %v489
    %v617 = vmul.f32 1.0, %v616
    %vm618 = vcmp.ge.f32.partialorder %v42, 0.0
    %vm619 = vcmp.ge.f32.partialorder %v43, 0.0
    %vm620 = vcmp.ge.f32.partialorder %v44, 0.0
    %vm621 = vcmp.ge.f32.partialorder %v45, 0.0
    %vm622 = vcmp.ge.f32.partialorder %v46, 0.0
    %vm623 = vcmp.ge.f32.partialorder %v47, 0.0
    %vm624 = vcmp.ge.f32.partialorder %v48, 0.0
    %vm625 = vcmp.ge.f32.partialorder %v49, 0.0
    %vm626 = vcmp.ge.f32.partialorder %v50, 0.0
    %vm627 = vcmp.ge.f32.partialorder %v51, 0.0
    %vm628 = vcmp.ge.f32.partialorder %v52, 0.0
    %vm629 = vcmp.ge.f32.partialorder %v53, 0.0
    %vm630 = vcmp.ge.f32.partialorder %v54, 0.0
    %vm631 = vcmp.ge.f32.partialorder %v55, 0.0
    %vm632 = vcmp.ge.f32.partialorder %v56, 0.0
    %vm633 = vcmp.ge.f32.partialorder %v57, 0.0
    %vm634 = vcmp.ge.f32.partialorder %v58, 0.0
    %vm635 = vcmp.ge.f32.partialorder %v59, 0.0
    %vm636 = vcmp.ge.f32.partialorder %v60, 0.0
    %vm637 = vcmp.ge.f32.partialorder %v61, 0.0
    %vm638 = vcmp.ge.f32.partialorder %v62, 0.0
    %vm639 = vcmp.ge.f32.partialorder %v63, 0.0
    %vm640 = vcmp.ge.f32.partialorder %v64, 0.0
    %vm641 = vcmp.ge.f32.partialorder %v65, 0.0
    %vm642 = vcmp.ge.f32.partialorder %v66, 0.0
    %vm643 = vcmp.ge.f32.partialorder %v67, 0.0
    %vm644 = vcmp.ge.f32.partialorder %v68, 0.0
    %vm645 = vcmp.ge.f32.partialorder %v69, 0.0
    %vm646 = vcmp.ge.f32.partialorder %v70, 0.0
    %vm647 = vcmp.ge.f32.partialorder %v71, 0.0
    %vm648 = vcmp.ge.f32.partialorder %v72, 0.0
    %vm649 = vcmp.ge.f32.partialorder %v73, 0.0
    %vm650 = vcmp.ge.f32.partialorder %v74, 0.0
    %vm651 = vcmp.ge.f32.partialorder %v75, 0.0
    %vm652 = vcmp.ge.f32.partialorder %v76, 0.0
    %vm653 = vcmp.ge.f32.partialorder %v77, 0.0
    %vm654 = vcmp.ge.f32.partialorder %v78, 0.0
    %vm655 = vcmp.ge.f32.partialorder %v79, 0.0
    %vm656 = vcmp.ge.f32.partialorder %v80, 0.0
    %vm657 = vcmp.ge.f32.partialorder %v81, 0.0
    %vm658 = vcmp.ge.f32.partialorder %v82, 0.0
    %vm659 = vcmp.ge.f32.partialorder %v83, 0.0
    %vm660 = vcmp.ge.f32.partialorder %v84, 0.0
    %vm661 = vcmp.ge.f32.partialorder %v85, 0.0
    %vm662 = vcmp.ge.f32.partialorder %v86, 0.0
    %vm663 = vcmp.ge.f32.partialorder %v87, 0.0
    %vm664 = vcmp.ge.f32.partialorder %v88, 0.0
    %vm665 = vcmp.ge.f32.partialorder %v89, 0.0
    %vm666 = vcmp.ge.f32.partialorder %v90, 0.0
    %vm667 = vcmp.ge.f32.partialorder %v91, 0.0
    %vm668 = vcmp.ge.f32.partialorder %v92, 0.0
    %vm669 = vcmp.ge.f32.partialorder %v93, 0.0
    %vm670 = vcmp.ge.f32.partialorder %v94, 0.0
    %vm671 = vcmp.ge.f32.partialorder %v95, 0.0
    %vm672 = vcmp.ge.f32.partialorder %v96, 0.0
    %vm673 = vcmp.ge.f32.partialorder %v97, 0.0
    %vm674 = vcmp.ge.f32.partialorder %v98, 0.0
    %vm675 = vcmp.ge.f32.partialorder %v99, 0.0
    %vm676 = vcmp.ge.f32.partialorder %v100, 0.0
    %vm677 = vcmp.ge.f32.partialorder %v101, 0.0
    %vm678 = vcmp.ge.f32.partialorder %v102, 0.0
    %vm679 = vcmp.ge.f32.partialorder %v103, 0.0
    %vm680 = vcmp.ge.f32.partialorder %v104, 0.0
    %vm681 = vcmp.ge.f32.partialorder %v105, 0.0
    %v682 = vsub.f32 1.0, %v491
    %v683 = vsub.f32 1.0, %v493
    %v684 = vsub.f32 1.0, %v495
    %v685 = vsub.f32 1.0, %v497
    %v686 = vsub.f32 1.0, %v499
    %v687 = vsub.f32 1.0, %v501
    %v688 = vsub.f32 1.0, %v503
    %v689 = vsub.f32 1.0, %v505
    %v690 = vsub.f32 1.0, %v507
    %v691 = vsub.f32 1.0, %v509
    %v692 = vsub.f32 1.0, %v511
    %v693 = vsub.f32 1.0, %v513
    %v694 = vsub.f32 1.0, %v515
    %v695 = vsub.f32 1.0, %v517
    %v696 = vsub.f32 1.0, %v519
    %v697 = vsub.f32 1.0, %v521
    %v698 = vsub.f32 1.0, %v523
    %v699 = vsub.f32 1.0, %v525
    %v700 = vsub.f32 1.0, %v527
    %v701 = vsub.f32 1.0, %v529
    %v702 = vsub.f32 1.0, %v531
    %v703 = vsub.f32 1.0, %v533
    %v704 = vsub.f32 1.0, %v535
    %v705 = vsub.f32 1.0, %v537
    %v706 = vsub.f32 1.0, %v539
    %v707 = vsub.f32 1.0, %v541
    %v708 = vsub.f32 1.0, %v543
    %v709 = vsub.f32 1.0, %v545
    %v710 = vsub.f32 1.0, %v547
    %v711 = vsub.f32 1.0, %v549
    %v712 = vsub.f32 1.0, %v551
    %v713 = vsub.f32 1.0, %v553
    %v714 = vsub.f32 1.0, %v555
    %v715 = vsub.f32 1.0, %v557
    %v716 = vsub.f32 1.0, %v559
    %v717 = vsub.f32 1.0, %v561
    %v718 = vsub.f32 1.0, %v563
    %v719 = vsub.f32 1.0, %v565
    %v720 = vsub.f32 1.0, %v567
    %v721 = vsub.f32 1.0, %v569
    %v722 = vsub.f32 1.0, %v571
    %v723 = vsub.f32 1.0, %v573
    %v724 = vsub.f32 1.0, %v575
    %v725 = vsub.f32 1.0, %v577
    %v726 = vsub.f32 1.0, %v579
    %v727 = vsub.f32 1.0, %v581
    %v728 = vsub.f32 1.0, %v583
    %v729 = vsub.f32 1.0, %v585
    %v730 = vsub.f32 1.0, %v587
    %v731 = vsub.f32 1.0, %v589
    %v732 = vsub.f32 1.0, %v591
    %v733 = vsub.f32 1.0, %v593
    %v734 = vsub.f32 1.0, %v595
    %v735 = vsub.f32 1.0, %v597
    %v736 = vsub.f32 1.0, %v599
    %v737 = vsub.f32 1.0, %v601
    %v738 = vsub.f32 1.0, %v603
    %v739 = vsub.f32 1.0, %v605
    %v740 = vsub.f32 1.0, %v607
    %v741 = vsub.f32 1.0, %v609
    %v742 = vsub.f32 1.0, %v611
    %v743 = vsub.f32 1.0, %v613
    %v744 = vsub.f32 1.0, %v615
    %v745 = vsub.f32 1.0, %v617
    %v746 = vsel %vm618, %v491, %v682
    %v747 = vsel %vm619, %v493, %v683
    %v748 = vsel %vm620, %v495, %v684
    %v749 = vsel %vm621, %v497, %v685
    %v750 = vsel %vm622, %v499, %v686
    %v751 = vsel %vm623, %v501, %v687
    %v752 = vsel %vm624, %v503, %v688
    %v753 = vsel %vm625, %v505, %v689
    %v754 = vsel %vm626, %v507, %v690
    %v755 = vsel %vm627, %v509, %v691
    %v756 = vsel %vm628, %v511, %v692
    %v757 = vsel %vm629, %v513, %v693
    %v758 = vsel %vm630, %v515, %v694
    %v759 = vsel %vm631, %v517, %v695
    %v760 = vsel %vm632, %v519, %v696
    %v761 = vsel %vm633, %v521, %v697
    %v762 = vsel %vm634, %v523, %v698
    %v763 = vsel %vm635, %v525, %v699
    %v764 = vsel %vm636, %v527, %v700
    %v765 = vsel %vm637, %v529, %v701
    %v766 = vsel %vm638, %v531, %v702
    %v767 = vsel %vm639, %v533, %v703
    %v768 = vsel %vm640, %v535, %v704
    %v769 = vsel %vm641, %v537, %v705
    %v770 = vsel %vm642, %v539, %v706
    %v771 = vsel %vm643, %v541, %v707
    %v772 = vsel %vm644, %v543, %v708
    %v773 = vsel %vm645, %v545, %v709
    %v774 = vsel %vm646, %v547, %v710
    %v775 = vsel %vm647, %v549, %v711
    %v776 = vsel %vm648, %v551, %v712
    %v777 = vsel %vm649, %v553, %v713
    %v778 = vsel %vm650, %v555, %v714
    %v779 = vsel %vm651, %v557, %v715
    %v780 = vsel %vm652, %v559, %v716
    %v781 = vsel %vm653, %v561, %v717
    %v782 = vsel %vm654, %v563, %v718
    %v783 = vsel %vm655, %v565, %v719
    %v784 = vsel %vm656, %v567, %v720
    %v785 = vsel %vm657, %v569, %v721
    %v786 = vsel %vm658, %v571, %v722
    %v787 = vsel %vm659, %v573, %v723
    %v788 = vsel %vm660, %v575, %v724
    %v789 = vsel %vm661, %v577, %v725
    %v790 = vsel %vm662, %v579, %v726
    %v791 = vsel %vm663, %v581, %v727
    %v792 = vsel %vm664, %v583, %v728
    %v793 = vsel %vm665, %v585, %v729
    %v794 = vsel %vm666, %v587, %v730
    %v795 = vsel %vm667, %v589, %v731
    %v796 = vsel %vm668, %v591, %v732
    %v797 = vsel %vm669, %v593, %v733
    %v798 = vsel %vm670, %v595, %v734
    %v799 = vsel %vm671, %v597, %v735
    %v800 = vsel %vm672, %v599, %v736
    %v801 = vsel %vm673, %v601, %v737
    %v802 = vsel %vm674, %v603, %v738
    %v803 = vsel %vm675, %v605, %v739
    %v804 = vsel %vm676, %v607, %v740
    %v805 = vsel %vm677, %v609, %v741
    %v806 = vsel %vm678, %v611, %v742
    %v807 = vsel %vm679, %v613, %v743
    %v808 = vsel %vm680, %v615, %v744
    %v809 = vsel %vm681, %v617, %v745
    %v810 = vmax.f32 %v42, 0.0
    %v811 = vmax.f32 %v43, 0.0
    %v812 = vmax.f32 %v44, 0.0
    %v813 = vmax.f32 %v45, 0.0
    %v814 = vmax.f32 %v46, 0.0
    %v815 = vmax.f32 %v47, 0.0
    %v816 = vmax.f32 %v48, 0.0
    %v817 = vmax.f32 %v49, 0.0
    %v818 = vmax.f32 %v50, 0.0
    %v819 = vmax.f32 %v51, 0.0
    %v820 = vmax.f32 %v52, 0.0
    %v821 = vmax.f32 %v53, 0.0
    %v822 = vmax.f32 %v54, 0.0
    %v823 = vmax.f32 %v55, 0.0
    %v824 = vmax.f32 %v56, 0.0
    %v825 = vmax.f32 %v57, 0.0
    %v826 = vmax.f32 %v58, 0.0
    %v827 = vmax.f32 %v59, 0.0
    %v828 = vmax.f32 %v60, 0.0
    %v829 = vmax.f32 %v61, 0.0
    %v830 = vmax.f32 %v62, 0.0
    %v831 = vmax.f32 %v63, 0.0
    %v832 = vmax.f32 %v64, 0.0
    %v833 = vmax.f32 %v65, 0.0
    %v834 = vmax.f32 %v66, 0.0
    %v835 = vmax.f32 %v67, 0.0
    %v836 = vmax.f32 %v68, 0.0
    %v837 = vmax.f32 %v69, 0.0
    %v838 = vmax.f32 %v70, 0.0
    %v839 = vmax.f32 %v71, 0.0
    %v840 = vmax.f32 %v72, 0.0
    %v841 = vmax.f32 %v73, 0.0
    %v842 = vmax.f32 %v74, 0.0
    %v843 = vmax.f32 %v75, 0.0
    %v844 = vmax.f32 %v76, 0.0
    %v845 = vmax.f32 %v77, 0.0
    %v846 = vmax.f32 %v78, 0.0
    %v847 = vmax.f32 %v79, 0.0
    %v848 = vmax.f32 %v80, 0.0
    %v849 = vmax.f32 %v81, 0.0
    %v850 = vmax.f32 %v82, 0.0
    %v851 = vmax.f32 %v83, 0.0
    %v852 = vmax.f32 %v84, 0.0
    %v853 = vmax.f32 %v85, 0.0
    %v854 = vmax.f32 %v86, 0.0
    %v855 = vmax.f32 %v87, 0.0
    %v856 = vmax.f32 %v88, 0.0
    %v857 = vmax.f32 %v89, 0.0
    %v858 = vmax.f32 %v90, 0.0
    %v859 = vmax.f32 %v91, 0.0
    %v860 = vmax.f32 %v92, 0.0
    %v861 = vmax.f32 %v93, 0.0
    %v862 = vmax.f32 %v94, 0.0
    %v863 = vmax.f32 %v95, 0.0
    %v864 = vmax.f32 %v96, 0.0
    %v865 = vmax.f32 %v97, 0.0
    %v866 = vmax.f32 %v98, 0.0
    %v867 = vmax.f32 %v99, 0.0
    %v868 = vmax.f32 %v100, 0.0
    %v869 = vmax.f32 %v101, 0.0
    %v870 = vmax.f32 %v102, 0.0
    %v871 = vmax.f32 %v103, 0.0
    %v872 = vmax.f32 %v104, 0.0
    %v873 = vmax.f32 %v105, 0.0
    %v874 = vmul.f32 %v42, %v106
    %v875 = vmul.f32 %v43, %v107
    %v876 = vmul.f32 %v44, %v108
    %v877 = vmul.f32 %v45, %v109
    %v878 = vmul.f32 %v46, %v110
    %v879 = vmul.f32 %v47, %v111
    %v880 = vmul.f32 %v48, %v112
    %v881 = vmul.f32 %v49, %v113
    %v882 = vmul.f32 %v50, %v114
    %v883 = vmul.f32 %v51, %v115
    %v884 = vmul.f32 %v52, %v116
    %v885 = vmul.f32 %v53, %v117
    %v886 = vmul.f32 %v54, %v118
    %v887 = vmul.f32 %v55, %v119
    %v888 = vmul.f32 %v56, %v120
    %v889 = vmul.f32 %v57, %v121
    %v890 = vmul.f32 %v58, %v122
    %v891 = vmul.f32 %v59, %v123
    %v892 = vmul.f32 %v60, %v124
    %v893 = vmul.f32 %v61, %v125
    %v894 = vmul.f32 %v62, %v126
    %v895 = vmul.f32 %v63, %v127
    %v896 = vmul.f32 %v64, %v128
    %v897 = vmul.f32 %v65, %v129
    %v898 = vmul.f32 %v66, %v130
    %v899 = vmul.f32 %v67, %v131
    %v900 = vmul.f32 %v68, %v132
    %v901 = vmul.f32 %v69, %v133
    %v902 = vmul.f32 %v70, %v134
    %v903 = vmul.f32 %v71, %v135
    %v904 = vmul.f32 %v72, %v136
    %v905 = vmul.f32 %v73, %v137
    %v906 = vmul.f32 %v74, %v138
    %v907 = vmul.f32 %v75, %v139
    %v908 = vmul.f32 %v76, %v140
    %v909 = vmul.f32 %v77, %v141
    %v910 = vmul.f32 %v78, %v142
    %v911 = vmul.f32 %v79, %v143
    %v912 = vmul.f32 %v80, %v144
    %v913 = vmul.f32 %v81, %v145
    %v914 = vmul.f32 %v82, %v146
    %v915 = vmul.f32 %v83, %v147
    %v916 = vmul.f32 %v84, %v148
    %v917 = vmul.f32 %v85, %v149
    %v918 = vmul.f32 %v86, %v150
    %v919 = vmul.f32 %v87, %v151
    %v920 = vmul.f32 %v88, %v152
    %v921 = vmul.f32 %v89, %v153
    %v922 = vmul.f32 %v90, %v154
    %v923 = vmul.f32 %v91, %v155
    %v924 = vmul.f32 %v92, %v156
    %v925 = vmul.f32 %v93, %v157
    %v926 = vmul.f32 %v94, %v158
    %v927 = vmul.f32 %v95, %v159
    %v928 = vmul.f32 %v96, %v160
    %v929 = vmul.f32 %v97, %v161
    %v930 = vmul.f32 %v98, %v162
    %v931 = vmul.f32 %v99, %v163
    %v932 = vmul.f32 %v100, %v164
    %v933 = vmul.f32 %v101, %v165
    %v934 = vmul.f32 %v102, %v166
    %v935 = vmul.f32 %v103, %v167
    %v936 = vmul.f32 %v104, %v168
    %v937 = vmul.f32 %v105, %v169
    %v938 = vsub.f32 %v810, %v874
    %v939 = vsub.f32 %v811, %v875
    %v940 = vsub.f32 %v812, %v876
    %v941 = vsub.f32 %v813, %v877
    %v942 = vsub.f32 %v814, %v878
    %v943 = vsub.f32 %v815, %v879
    %v944 = vsub.f32 %v816, %v880
    %v945 = vsub.f32 %v817, %v881
    %v946 = vsub.f32 %v818, %v882
    %v947 = vsub.f32 %v819, %v883
    %v948 = vsub.f32 %v820, %v884
    %v949 = vsub.f32 %v821, %v885
    %v950 = vsub.f32 %v822, %v886
    %v951 = vsub.f32 %v823, %v887
    %v952 = vsub.f32 %v824, %v888
    %v953 = vsub.f32 %v825, %v889
    %v954 = vsub.f32 %v826, %v890
    %v955 = vsub.f32 %v827, %v891
    %v956 = vsub.f32 %v828, %v892
    %v957 = vsub.f32 %v829, %v893
    %v958 = vsub.f32 %v830, %v894
    %v959 = vsub.f32 %v831, %v895
    %v960 = vsub.f32 %v832, %v896
    %v961 = vsub.f32 %v833, %v897
    %v962 = vsub.f32 %v834, %v898
    %v963 = vsub.f32 %v835, %v899
    %v964 = vsub.f32 %v836, %v900
    %v965 = vsub.f32 %v837, %v901
    %v966 = vsub.f32 %v838, %v902
    %v967 = vsub.f32 %v839, %v903
    %v968 = vsub.f32 %v840, %v904
    %v969 = vsub.f32 %v841, %v905
    %v970 = vsub.f32 %v842, %v906
    %v971 = vsub.f32 %v843, %v907
    %v972 = vsub.f32 %v844, %v908
    %v973 = vsub.f32 %v845, %v909
    %v974 = vsub.f32 %v846, %v910
    %v975 = vsub.f32 %v847, %v911
    %v976 = vsub.f32 %v848, %v912
    %v977 = vsub.f32 %v849, %v913
    %v978 = vsub.f32 %v850, %v914
    %v979 = vsub.f32 %v851, %v915
    %v980 = vsub.f32 %v852, %v916
    %v981 = vsub.f32 %v853, %v917
    %v982 = vsub.f32 %v854, %v918
    %v983 = vsub.f32 %v855, %v919
    %v984 = vsub.f32 %v856, %v920
    %v985 = vsub.f32 %v857, %v921
    %v986 = vsub.f32 %v858, %v922
    %v987 = vsub.f32 %v859, %v923
    %v988 = vsub.f32 %v860, %v924
    %v989 = vsub.f32 %v861, %v925
    %v990 = vsub.f32 %v862, %v926
    %v991 = vsub.f32 %v863, %v927
    %v992 = vsub.f32 %v864, %v928
    %v993 = vsub.f32 %v865, %v929
    %v994 = vsub.f32 %v866, %v930
    %v995 = vsub.f32 %v867, %v931
    %v996 = vsub.f32 %v868, %v932
    %v997 = vsub.f32 %v869, %v933
    %v998 = vsub.f32 %v870, %v934
    %v999 = vsub.f32 %v871, %v935
    %v1000 = vsub.f32 %v872, %v936
    %v1001 = vsub.f32 %v873, %v937
    %v1002 = vadd.f32 %v299, 1.0
    %v1003 = vlog2.pop %v1002
    %v1004 = vmul.f32 %v1003, 0.6931472
    %v1005 = vmul.f32 -0.5, %v299
    %v1006 = vadd.f32 %v1005, 1.0
    %v1007 = vmul.f32 %v1006, %v299
    %v1008 = vand.u32 2147483647, %v299
    %vm1009 = vcmp.lt.f32.partialorder %v1008, 0.0004427343
    %v1010 = vsel %vm1009, %v1007, %v1004
    %v1011 = vadd.f32 %v301, 1.0
    %v1012 = vlog2.pop %v1011
    %v1013 = vmul.f32 %v1012, 0.6931472
    %v1014 = vmul.f32 -0.5, %v301
    %v1015 = vadd.f32 %v1014, 1.0
    %v1016 = vmul.f32 %v1015, %v301
    %v1017 = vand.u32 2147483647, %v301
    %vm1018 = vcmp.lt.f32.partialorder %v1017, 0.0004427343
    %v1019 = vsel %vm1018, %v1016, %v1013
    %v1020 = vadd.f32 %v303, 1.0
    %v1021 = vlog2.pop %v1020
    %v1022 = vmul.f32 %v1021, 0.6931472
    %v1023 = vmul.f32 -0.5, %v303
    %v1024 = vadd.f32 %v1023, 1.0
    %v1025 = vmul.f32 %v1024, %v303
    %v1026 = vand.u32 2147483647, %v303
    %vm1027 = vcmp.lt.f32.partialorder %v1026, 0.0004427343
    %v1028 = vsel %vm1027, %v1025, %v1022
    %v1029 = vadd.f32 %v305, 1.0
    %v1030 = vlog2.pop %v1029
    %v1031 = vmul.f32 %v1030, 0.6931472
    %v1032 = vmul.f32 -0.5, %v305
    %v1033 = vadd.f32 %v1032, 1.0
    %v1034 = vmul.f32 %v1033, %v305
    %v1035 = vand.u32 2147483647, %v305
    %vm1036 = vcmp.lt.f32.partialorder %v1035, 0.0004427343
    %v1037 = vsel %vm1036, %v1034, %v1031
    %v1038 = vadd.f32 %v307, 1.0
    %v1039 = vlog2.pop %v1038
    %v1040 = vmul.f32 %v1039, 0.6931472
    %v1041 = vmul.f32 -0.5, %v307
    %v1042 = vadd.f32 %v1041, 1.0
    %v1043 = vmul.f32 %v1042, %v307
    %v1044 = vand.u32 2147483647, %v307
    %vm1045 = vcmp.lt.f32.partialorder %v1044, 0.0004427343
    %v1046 = vsel %vm1045, %v1043, %v1040
    %v1047 = vadd.f32 %v309, 1.0
    %v1048 = vlog2.pop %v1047
    %v1049 = vmul.f32 %v1048, 0.6931472
    %v1050 = vmul.f32 -0.5, %v309
    %v1051 = vadd.f32 %v1050, 1.0
    %v1052 = vmul.f32 %v1051, %v309
    %v1053 = vand.u32 2147483647, %v309
    %vm1054 = vcmp.lt.f32.partialorder %v1053, 0.0004427343
    %v1055 = vsel %vm1054, %v1052, %v1049
    %v1056 = vadd.f32 %v311, 1.0
    %v1057 = vlog2.pop %v1056
    %v1058 = vmul.f32 %v1057, 0.6931472
    %v1059 = vmul.f32 -0.5, %v311
    %v1060 = vadd.f32 %v1059, 1.0
    %v1061 = vmul.f32 %v1060, %v311
    %v1062 = vand.u32 2147483647, %v311
    %vm1063 = vcmp.lt.f32.partialorder %v1062, 0.0004427343
    %v1064 = vsel %vm1063, %v1061, %v1058
    %v1065 = vadd.f32 %v313, 1.0
    %v1066 = vlog2.pop %v1065
    %v1067 = vmul.f32 %v1066, 0.6931472
    %v1068 = vmul.f32 -0.5, %v313
    %v1069 = vadd.f32 %v1068, 1.0
    %v1070 = vmul.f32 %v1069, %v313
    %v1071 = vand.u32 2147483647, %v313
    %vm1072 = vcmp.lt.f32.partialorder %v1071, 0.0004427343
    %v1073 = vsel %vm1072, %v1070, %v1067
    %v1074 = vadd.f32 %v315, 1.0
    %v1075 = vlog2.pop %v1074
    %v1076 = vmul.f32 %v1075, 0.6931472
    %v1077 = vmul.f32 -0.5, %v315
    %v1078 = vadd.f32 %v1077, 1.0
    %v1079 = vmul.f32 %v1078, %v315
    %v1080 = vand.u32 2147483647, %v315
    %vm1081 = vcmp.lt.f32.partialorder %v1080, 0.0004427343
    %v1082 = vsel %vm1081, %v1079, %v1076
    %v1083 = vadd.f32 %v317, 1.0
    %v1084 = vlog2.pop %v1083
    %v1085 = vmul.f32 %v1084, 0.6931472
    %v1086 = vmul.f32 -0.5, %v317
    %v1087 = vadd.f32 %v1086, 1.0
    %v1088 = vmul.f32 %v1087, %v317
    %v1089 = vand.u32 2147483647, %v317
    %vm1090 = vcmp.lt.f32.partialorder %v1089, 0.0004427343
    %v1091 = vsel %vm1090, %v1088, %v1085
    %v1092 = vadd.f32 %v319, 1.0
    %v1093 = vlog2.pop %v1092
    %v1094 = vmul.f32 %v1093, 0.6931472
    %v1095 = vmul.f32 -0.5, %v319
    %v1096 = vadd.f32 %v1095, 1.0
    %v1097 = vmul.f32 %v1096, %v319
    %v1098 = vand.u32 2147483647, %v319
    %vm1099 = vcmp.lt.f32.partialorder %v1098, 0.0004427343
    %v1100 = vsel %vm1099, %v1097, %v1094
    %v1101 = vadd.f32 %v321, 1.0
    %v1102 = vlog2.pop %v1101
    %v1103 = vmul.f32 %v1102, 0.6931472
    %v1104 = vmul.f32 -0.5, %v321
    %v1105 = vadd.f32 %v1104, 1.0
    %v1106 = vmul.f32 %v1105, %v321
    %v1107 = vand.u32 2147483647, %v321
    %vm1108 = vcmp.lt.f32.partialorder %v1107, 0.0004427343
    %v1109 = vsel %vm1108, %v1106, %v1103
    %v1110 = vadd.f32 %v323, 1.0
    %v1111 = vlog2.pop %v1110
    %v1112 = vmul.f32 %v1111, 0.6931472
    %v1113 = vmul.f32 -0.5, %v323
    %v1114 = vadd.f32 %v1113, 1.0
    %v1115 = vmul.f32 %v1114, %v323
    %v1116 = vand.u32 2147483647, %v323
    %vm1117 = vcmp.lt.f32.partialorder %v1116, 0.0004427343
    %v1118 = vsel %vm1117, %v1115, %v1112
    %v1119 = vadd.f32 %v325, 1.0
    %v1120 = vlog2.pop %v1119
    %v1121 = vmul.f32 %v1120, 0.6931472
    %v1122 = vmul.f32 -0.5, %v325
    %v1123 = vadd.f32 %v1122, 1.0
    %v1124 = vmul.f32 %v1123, %v325
    %v1125 = vand.u32 2147483647, %v325
    %vm1126 = vcmp.lt.f32.partialorder %v1125, 0.0004427343
    %v1127 = vsel %vm1126, %v1124, %v1121
    %v1128 = vadd.f32 %v327, 1.0
    %v1129 = vlog2.pop %v1128
    %v1130 = vmul.f32 %v1129, 0.6931472
    %v1131 = vmul.f32 -0.5, %v327
    %v1132 = vadd.f32 %v1131, 1.0
    %v1133 = vmul.f32 %v1132, %v327
    %v1134 = vand.u32 2147483647, %v327
    %vm1135 = vcmp.lt.f32.partialorder %v1134, 0.0004427343
    %v1136 = vsel %vm1135, %v1133, %v1130
    %v1137 = vadd.f32 %v329, 1.0
    %v1138 = vlog2.pop %v1137
    %v1139 = vmul.f32 %v1138, 0.6931472
    %v1140 = vmul.f32 -0.5, %v329
    %v1141 = vadd.f32 %v1140, 1.0
    %v1142 = vmul.f32 %v1141, %v329
    %v1143 = vand.u32 2147483647, %v329
    %vm1144 = vcmp.lt.f32.partialorder %v1143, 0.0004427343
    %v1145 = vsel %vm1144, %v1142, %v1139
    %v1146 = vadd.f32 %v331, 1.0
    %v1147 = vlog2.pop %v1146
    %v1148 = vmul.f32 %v1147, 0.6931472
    %v1149 = vmul.f32 -0.5, %v331
    %v1150 = vadd.f32 %v1149, 1.0
    %v1151 = vmul.f32 %v1150, %v331
    %v1152 = vand.u32 2147483647, %v331
    %vm1153 = vcmp.lt.f32.partialorder %v1152, 0.0004427343
    %v1154 = vsel %vm1153, %v1151, %v1148
    %v1155 = vadd.f32 %v333, 1.0
    %v1156 = vlog2.pop %v1155
    %v1157 = vmul.f32 %v1156, 0.6931472
    %v1158 = vmul.f32 -0.5, %v333
    %v1159 = vadd.f32 %v1158, 1.0
    %v1160 = vmul.f32 %v1159, %v333
    %v1161 = vand.u32 2147483647, %v333
    %vm1162 = vcmp.lt.f32.partialorder %v1161, 0.0004427343
    %v1163 = vsel %vm1162, %v1160, %v1157
    %v1164 = vadd.f32 %v335, 1.0
    %v1165 = vlog2.pop %v1164
    %v1166 = vmul.f32 %v1165, 0.6931472
    %v1167 = vmul.f32 -0.5, %v335
    %v1168 = vadd.f32 %v1167, 1.0
    %v1169 = vmul.f32 %v1168, %v335
    %v1170 = vand.u32 2147483647, %v335
    %vm1171 = vcmp.lt.f32.partialorder %v1170, 0.0004427343
    %v1172 = vsel %vm1171, %v1169, %v1166
    %v1173 = vadd.f32 %v337, 1.0
    %v1174 = vlog2.pop %v1173
    %v1175 = vmul.f32 %v1174, 0.6931472
    %v1176 = vmul.f32 -0.5, %v337
    %v1177 = vadd.f32 %v1176, 1.0
    %v1178 = vmul.f32 %v1177, %v337
    %v1179 = vand.u32 2147483647, %v337
    %vm1180 = vcmp.lt.f32.partialorder %v1179, 0.0004427343
    %v1181 = vsel %vm1180, %v1178, %v1175
    %v1182 = vadd.f32 %v339, 1.0
    %v1183 = vlog2.pop %v1182
    %v1184 = vmul.f32 %v1183, 0.6931472
    %v1185 = vmul.f32 -0.5, %v339
    %v1186 = vadd.f32 %v1185, 1.0
    %v1187 = vmul.f32 %v1186, %v339
    %v1188 = vand.u32 2147483647, %v339
    %vm1189 = vcmp.lt.f32.partialorder %v1188, 0.0004427343
    %v1190 = vsel %vm1189, %v1187, %v1184
    %v1191 = vadd.f32 %v341, 1.0
    %v1192 = vlog2.pop %v1191
    %v1193 = vmul.f32 %v1192, 0.6931472
    %v1194 = vmul.f32 -0.5, %v341
    %v1195 = vadd.f32 %v1194, 1.0
    %v1196 = vmul.f32 %v1195, %v341
    %v1197 = vand.u32 2147483647, %v341
    %vm1198 = vcmp.lt.f32.partialorder %v1197, 0.0004427343
    %v1199 = vsel %vm1198, %v1196, %v1193
    %v1200 = vadd.f32 %v343, 1.0
    %v1201 = vlog2.pop %v1200
    %v1202 = vmul.f32 %v1201, 0.6931472
    %v1203 = vmul.f32 -0.5, %v343
    %v1204 = vadd.f32 %v1203, 1.0
    %v1205 = vmul.f32 %v1204, %v343
    %v1206 = vand.u32 2147483647, %v343
    %vm1207 = vcmp.lt.f32.partialorder %v1206, 0.0004427343
    %v1208 = vsel %vm1207, %v1205, %v1202
    %v1209 = vadd.f32 %v345, 1.0
    %v1210 = vlog2.pop %v1209
    %v1211 = vmul.f32 %v1210, 0.6931472
    %v1212 = vmul.f32 -0.5, %v345
    %v1213 = vadd.f32 %v1212, 1.0
    %v1214 = vmul.f32 %v1213, %v345
    %v1215 = vand.u32 2147483647, %v345
    %vm1216 = vcmp.lt.f32.partialorder %v1215, 0.0004427343
    %v1217 = vsel %vm1216, %v1214, %v1211
    %v1218 = vadd.f32 %v347, 1.0
    %v1219 = vlog2.pop %v1218
    %v1220 = vmul.f32 %v1219, 0.6931472
    %v1221 = vmul.f32 -0.5, %v347
    %v1222 = vadd.f32 %v1221, 1.0
    %v1223 = vmul.f32 %v1222, %v347
    %v1224 = vand.u32 2147483647, %v347
    %vm1225 = vcmp.lt.f32.partialorder %v1224, 0.0004427343
    %v1226 = vsel %vm1225, %v1223, %v1220
    %v1227 = vadd.f32 %v349, 1.0
    %v1228 = vlog2.pop %v1227
    %v1229 = vmul.f32 %v1228, 0.6931472
    %v1230 = vmul.f32 -0.5, %v349
    %v1231 = vadd.f32 %v1230, 1.0
    %v1232 = vmul.f32 %v1231, %v349
    %v1233 = vand.u32 2147483647, %v349
    %vm1234 = vcmp.lt.f32.partialorder %v1233, 0.0004427343
    %v1235 = vsel %vm1234, %v1232, %v1229
    %v1236 = vadd.f32 %v351, 1.0
    %v1237 = vlog2.pop %v1236
    %v1238 = vmul.f32 %v1237, 0.6931472
    %v1239 = vmul.f32 -0.5, %v351
    %v1240 = vadd.f32 %v1239, 1.0
    %v1241 = vmul.f32 %v1240, %v351
    %v1242 = vand.u32 2147483647, %v351
    %vm1243 = vcmp.lt.f32.partialorder %v1242, 0.0004427343
    %v1244 = vsel %vm1243, %v1241, %v1238
    %v1245 = vadd.f32 %v353, 1.0
    %v1246 = vlog2.pop %v1245
    %v1247 = vmul.f32 %v1246, 0.6931472
    %v1248 = vmul.f32 -0.5, %v353
    %v1249 = vadd.f32 %v1248, 1.0
    %v1250 = vmul.f32 %v1249, %v353
    %v1251 = vand.u32 2147483647, %v353
    %vm1252 = vcmp.lt.f32.partialorder %v1251, 0.0004427343
    %v1253 = vsel %vm1252, %v1250, %v1247
    %v1254 = vadd.f32 %v355, 1.0
    %v1255 = vlog2.pop %v1254
    %v1256 = vmul.f32 %v1255, 0.6931472
    %v1257 = vmul.f32 -0.5, %v355
    %v1258 = vadd.f32 %v1257, 1.0
    %v1259 = vmul.f32 %v1258, %v355
    %v1260 = vand.u32 2147483647, %v355
    %vm1261 = vcmp.lt.f32.partialorder %v1260, 0.0004427343
    %v1262 = vsel %vm1261, %v1259, %v1256
    %v1263 = vadd.f32 %v357, 1.0
    %v1264 = vlog2.pop %v1263
    %v1265 = vmul.f32 %v1264, 0.6931472
    %v1266 = vmul.f32 -0.5, %v357
    %v1267 = vadd.f32 %v1266, 1.0
    %v1268 = vmul.f32 %v1267, %v357
    %v1269 = vand.u32 2147483647, %v357
    %vm1270 = vcmp.lt.f32.partialorder %v1269, 0.0004427343
    %v1271 = vsel %vm1270, %v1268, %v1265
    %v1272 = vadd.f32 %v359, 1.0
    %v1273 = vlog2.pop %v1272
    %v1274 = vmul.f32 %v1273, 0.6931472
    %v1275 = vmul.f32 -0.5, %v359
    %v1276 = vadd.f32 %v1275, 1.0
    %v1277 = vmul.f32 %v1276, %v359
    %v1278 = vand.u32 2147483647, %v359
    %vm1279 = vcmp.lt.f32.partialorder %v1278, 0.0004427343
    %v1280 = vsel %vm1279, %v1277, %v1274
    %v1281 = vadd.f32 %v361, 1.0
    %v1282 = vlog2.pop %v1281
    %v1283 = vmul.f32 %v1282, 0.6931472
    %v1284 = vmul.f32 -0.5, %v361
    %v1285 = vadd.f32 %v1284, 1.0
    %v1286 = vmul.f32 %v1285, %v361
    %v1287 = vand.u32 2147483647, %v361
    %vm1288 = vcmp.lt.f32.partialorder %v1287, 0.0004427343
    %v1289 = vsel %vm1288, %v1286, %v1283
    %v1290 = vadd.f32 %v363, 1.0
    %v1291 = vlog2.pop %v1290
    %v1292 = vmul.f32 %v1291, 0.6931472
    %v1293 = vmul.f32 -0.5, %v363
    %v1294 = vadd.f32 %v1293, 1.0
    %v1295 = vmul.f32 %v1294, %v363
    %v1296 = vand.u32 2147483647, %v363
    %vm1297 = vcmp.lt.f32.partialorder %v1296, 0.0004427343
    %v1298 = vsel %vm1297, %v1295, %v1292
    %v1299 = vadd.f32 %v365, 1.0
    %v1300 = vlog2.pop %v1299
    %v1301 = vmul.f32 %v1300, 0.6931472
    %v1302 = vmul.f32 -0.5, %v365
    %v1303 = vadd.f32 %v1302, 1.0
    %v1304 = vmul.f32 %v1303, %v365
    %v1305 = vand.u32 2147483647, %v365
    %vm1306 = vcmp.lt.f32.partialorder %v1305, 0.0004427343
    %v1307 = vsel %vm1306, %v1304, %v1301
    %v1308 = vadd.f32 %v367, 1.0
    %v1309 = vlog2.pop %v1308
    %v1310 = vmul.f32 %v1309, 0.6931472
    %v1311 = vmul.f32 -0.5, %v367
    %v1312 = vadd.f32 %v1311, 1.0
    %v1313 = vmul.f32 %v1312, %v367
    %v1314 = vand.u32 2147483647, %v367
    %vm1315 = vcmp.lt.f32.partialorder %v1314, 0.0004427343
    %v1316 = vsel %vm1315, %v1313, %v1310
    %v1317 = vadd.f32 %v369, 1.0
    %v1318 = vlog2.pop %v1317
    %v1319 = vmul.f32 %v1318, 0.6931472
    %v1320 = vmul.f32 -0.5, %v369
    %v1321 = vadd.f32 %v1320, 1.0
    %v1322 = vmul.f32 %v1321, %v369
    %v1323 = vand.u32 2147483647, %v369
    %vm1324 = vcmp.lt.f32.partialorder %v1323, 0.0004427343
    %v1325 = vsel %vm1324, %v1322, %v1319
    %v1326 = vadd.f32 %v371, 1.0
    %v1327 = vlog2.pop %v1326
    %v1328 = vmul.f32 %v1327, 0.6931472
    %v1329 = vmul.f32 -0.5, %v371
    %v1330 = vadd.f32 %v1329, 1.0
    %v1331 = vmul.f32 %v1330, %v371
    %v1332 = vand.u32 2147483647, %v371
    %vm1333 = vcmp.lt.f32.partialorder %v1332, 0.0004427343
    %v1334 = vsel %vm1333, %v1331, %v1328
    %v1335 = vadd.f32 %v373, 1.0
    %v1336 = vlog2.pop %v1335
    %v1337 = vmul.f32 %v1336, 0.6931472
    %v1338 = vmul.f32 -0.5, %v373
    %v1339 = vadd.f32 %v1338, 1.0
    %v1340 = vmul.f32 %v1339, %v373
    %v1341 = vand.u32 2147483647, %v373
    %vm1342 = vcmp.lt.f32.partialorder %v1341, 0.0004427343
    %v1343 = vsel %vm1342, %v1340, %v1337
    %v1344 = vadd.f32 %v375, 1.0
    %v1345 = vlog2.pop %v1344
    %v1346 = vmul.f32 %v1345, 0.6931472
    %v1347 = vmul.f32 -0.5, %v375
    %v1348 = vadd.f32 %v1347, 1.0
    %v1349 = vmul.f32 %v1348, %v375
    %v1350 = vand.u32 2147483647, %v375
    %vm1351 = vcmp.lt.f32.partialorder %v1350, 0.0004427343
    %v1352 = vsel %vm1351, %v1349, %v1346
    %v1353 = vadd.f32 %v377, 1.0
    %v1354 = vlog2.pop %v1353
    %v1355 = vmul.f32 %v1354, 0.6931472
    %v1356 = vmul.f32 -0.5, %v377
    %v1357 = vadd.f32 %v1356, 1.0
    %v1358 = vmul.f32 %v1357, %v377
    %v1359 = vand.u32 2147483647, %v377
    %vm1360 = vcmp.lt.f32.partialorder %v1359, 0.0004427343
    %v1361 = vsel %vm1360, %v1358, %v1355
    %v1362 = vadd.f32 %v379, 1.0
    %v1363 = vlog2.pop %v1362
    %v1364 = vmul.f32 %v1363, 0.6931472
    %v1365 = vmul.f32 -0.5, %v379
    %v1366 = vadd.f32 %v1365, 1.0
    %v1367 = vmul.f32 %v1366, %v379
    %v1368 = vand.u32 2147483647, %v379
    %vm1369 = vcmp.lt.f32.partialorder %v1368, 0.0004427343
    %v1370 = vsel %vm1369, %v1367, %v1364
    %v1371 = vadd.f32 %v381, 1.0
    %v1372 = vlog2.pop %v1371
    %v1373 = vmul.f32 %v1372, 0.6931472
    %v1374 = vmul.f32 -0.5, %v381
    %v1375 = vadd.f32 %v1374, 1.0
    %v1376 = vmul.f32 %v1375, %v381
    %v1377 = vand.u32 2147483647, %v381
    %vm1378 = vcmp.lt.f32.partialorder %v1377, 0.0004427343
    %v1379 = vsel %vm1378, %v1376, %v1373
    %v1380 = vadd.f32 %v383, 1.0
    %v1381 = vlog2.pop %v1380
    %v1382 = vmul.f32 %v1381, 0.6931472
    %v1383 = vmul.f32 -0.5, %v383
    %v1384 = vadd.f32 %v1383, 1.0
    %v1385 = vmul.f32 %v1384, %v383
    %v1386 = vand.u32 2147483647, %v383
    %vm1387 = vcmp.lt.f32.partialorder %v1386, 0.0004427343
    %v1388 = vsel %vm1387, %v1385, %v1382
    %v1389 = vadd.f32 %v385, 1.0
    %v1390 = vlog2.pop %v1389
    %v1391 = vmul.f32 %v1390, 0.6931472
    %v1392 = vmul.f32 -0.5, %v385
    %v1393 = vadd.f32 %v1392, 1.0
    %v1394 = vmul.f32 %v1393, %v385
    %v1395 = vand.u32 2147483647, %v385
    %vm1396 = vcmp.lt.f32.partialorder %v1395, 0.0004427343
    %v1397 = vsel %vm1396, %v1394, %v1391
    %v1398 = vadd.f32 %v387, 1.0
    %v1399 = vlog2.pop %v1398
    %v1400 = vmul.f32 %v1399, 0.6931472
    %v1401 = vmul.f32 -0.5, %v387
    %v1402 = vadd.f32 %v1401, 1.0
    %v1403 = vmul.f32 %v1402, %v387
    %v1404 = vand.u32 2147483647, %v387
    %vm1405 = vcmp.lt.f32.partialorder %v1404, 0.0004427343
    %v1406 = vsel %vm1405, %v1403, %v1400
    %v1407 = vadd.f32 %v389, 1.0
    %v1408 = vlog2.pop %v1407
    %v1409 = vmul.f32 %v1408, 0.6931472
    %v1410 = vmul.f32 -0.5, %v389
    %v1411 = vadd.f32 %v1410, 1.0
    %v1412 = vmul.f32 %v1411, %v389
    %v1413 = vand.u32 2147483647, %v389
    %vm1414 = vcmp.lt.f32.partialorder %v1413, 0.0004427343
    %v1415 = vsel %vm1414, %v1412, %v1409
    %v1416 = vadd.f32 %v391, 1.0
    %v1417 = vlog2.pop %v1416
    %v1418 = vmul.f32 %v1417, 0.6931472
    %v1419 = vmul.f32 -0.5, %v391
    %v1420 = vadd.f32 %v1419, 1.0
    %v1421 = vmul.f32 %v1420, %v391
    %v1422 = vand.u32 2147483647, %v391
    %vm1423 = vcmp.lt.f32.partialorder %v1422, 0.0004427343
    %v1424 = vsel %vm1423, %v1421, %v1418
    %v1425 = vadd.f32 %v393, 1.0
    %v1426 = vlog2.pop %v1425
    %v1427 = vmul.f32 %v1426, 0.6931472
    %v1428 = vmul.f32 -0.5, %v393
    %v1429 = vadd.f32 %v1428, 1.0
    %v1430 = vmul.f32 %v1429, %v393
    %v1431 = vand.u32 2147483647, %v393
    %vm1432 = vcmp.lt.f32.partialorder %v1431, 0.0004427343
    %v1433 = vsel %vm1432, %v1430, %v1427
    %v1434 = vadd.f32 %v395, 1.0
    %v1435 = vlog2.pop %v1434
    %v1436 = vmul.f32 %v1435, 0.6931472
    %v1437 = vmul.f32 -0.5, %v395
    %v1438 = vadd.f32 %v1437, 1.0
    %v1439 = vmul.f32 %v1438, %v395
    %v1440 = vand.u32 2147483647, %v395
    %vm1441 = vcmp.lt.f32.partialorder %v1440, 0.0004427343
    %v1442 = vsel %vm1441, %v1439, %v1436
    %v1443 = vadd.f32 %v397, 1.0
    %v1444 = vlog2.pop %v1443
    %v1445 = vmul.f32 %v1444, 0.6931472
    %v1446 = vmul.f32 -0.5, %v397
    %v1447 = vadd.f32 %v1446, 1.0
    %v1448 = vmul.f32 %v1447, %v397
    %v1449 = vand.u32 2147483647, %v397
    %vm1450 = vcmp.lt.f32.partialorder %v1449, 0.0004427343
    %v1451 = vsel %vm1450, %v1448, %v1445
    %v1452 = vadd.f32 %v399, 1.0
    %v1453 = vlog2.pop %v1452
    %v1454 = vmul.f32 %v1453, 0.6931472
    %v1455 = vmul.f32 -0.5, %v399
    %v1456 = vadd.f32 %v1455, 1.0
    %v1457 = vmul.f32 %v1456, %v399
    %v1458 = vand.u32 2147483647, %v399
    %vm1459 = vcmp.lt.f32.partialorder %v1458, 0.0004427343
    %v1460 = vsel %vm1459, %v1457, %v1454
    %v1461 = vadd.f32 %v401, 1.0
    %v1462 = vlog2.pop %v1461
    %v1463 = vmul.f32 %v1462, 0.6931472
    %v1464 = vmul.f32 -0.5, %v401
    %v1465 = vadd.f32 %v1464, 1.0
    %v1466 = vmul.f32 %v1465, %v401
    %v1467 = vand.u32 2147483647, %v401
    %vm1468 = vcmp.lt.f32.partialorder %v1467, 0.0004427343
    %v1469 = vsel %vm1468, %v1466, %v1463
    %v1470 = vadd.f32 %v403, 1.0
    %v1471 = vlog2.pop %v1470
    %v1472 = vmul.f32 %v1471, 0.6931472
    %v1473 = vmul.f32 -0.5, %v403
    %v1474 = vadd.f32 %v1473, 1.0
    %v1475 = vmul.f32 %v1474, %v403
    %v1476 = vand.u32 2147483647, %v403
    %vm1477 = vcmp.lt.f32.partialorder %v1476, 0.0004427343
    %v1478 = vsel %vm1477, %v1475, %v1472
    %v1479 = vadd.f32 %v405, 1.0
    %v1480 = vlog2.pop %v1479
    %v1481 = vmul.f32 %v1480, 0.6931472
    %v1482 = vmul.f32 -0.5, %v405
    %v1483 = vadd.f32 %v1482, 1.0
    %v1484 = vmul.f32 %v1483, %v405
    %v1485 = vand.u32 2147483647, %v405
    %vm1486 = vcmp.lt.f32.partialorder %v1485, 0.0004427343
    %v1487 = vsel %vm1486, %v1484, %v1481
    %v1488 = vadd.f32 %v407, 1.0
    %v1489 = vlog2.pop %v1488
    %v1490 = vmul.f32 %v1489, 0.6931472
    %v1491 = vmul.f32 -0.5, %v407
    %v1492 = vadd.f32 %v1491, 1.0
    %v1493 = vmul.f32 %v1492, %v407
    %v1494 = vand.u32 2147483647, %v407
    %vm1495 = vcmp.lt.f32.partialorder %v1494, 0.0004427343
    %v1496 = vsel %vm1495, %v1493, %v1490
    %v1497 = vadd.f32 %v409, 1.0
    %v1498 = vlog2.pop %v1497
    %v1499 = vmul.f32 %v1498, 0.6931472
    %v1500 = vmul.f32 -0.5, %v409
    %v1501 = vadd.f32 %v1500, 1.0
    %v1502 = vmul.f32 %v1501, %v409
    %v1503 = vand.u32 2147483647, %v409
    %vm1504 = vcmp.lt.f32.partialorder %v1503, 0.0004427343
    %v1505 = vsel %vm1504, %v1502, %v1499
    %v1506 = vadd.f32 %v411, 1.0
    %v1507 = vlog2.pop %v1506
    %v1508 = vmul.f32 %v1507, 0.6931472
    %v1509 = vmul.f32 -0.5, %v411
    %v1510 = vadd.f32 %v1509, 1.0
    %v1511 = vmul.f32 %v1510, %v411
    %v1512 = vand.u32 2147483647, %v411
    %vm1513 = vcmp.lt.f32.partialorder %v1512, 0.0004427343
    %v1514 = vsel %vm1513, %v1511, %v1508
    %v1515 = vadd.f32 %v413, 1.0
    %v1516 = vlog2.pop %v1515
    %v1517 = vmul.f32 %v1516, 0.6931472
    %v1518 = vmul.f32 -0.5, %v413
    %v1519 = vadd.f32 %v1518, 1.0
    %v1520 = vmul.f32 %v1519, %v413
    %v1521 = vand.u32 2147483647, %v413
    %vm1522 = vcmp.lt.f32.partialorder %v1521, 0.0004427343
    %v1523 = vsel %vm1522, %v1520, %v1517
    %v1524 = vadd.f32 %v415, 1.0
    %v1525 = vlog2.pop %v1524
    %v1526 = vmul.f32 %v1525, 0.6931472
    %v1527 = vmul.f32 -0.5, %v415
    %v1528 = vadd.f32 %v1527, 1.0
    %v1529 = vmul.f32 %v1528, %v415
    %v1530 = vand.u32 2147483647, %v415
    %vm1531 = vcmp.lt.f32.partialorder %v1530, 0.0004427343
    %v1532 = vsel %vm1531, %v1529, %v1526
    %v1533 = vadd.f32 %v417, 1.0
    %v1534 = vlog2.pop %v1533
    %v1535 = vmul.f32 %v1534, 0.6931472
    %v1536 = vmul.f32 -0.5, %v417
    %v1537 = vadd.f32 %v1536, 1.0
    %v1538 = vmul.f32 %v1537, %v417
    %v1539 = vand.u32 2147483647, %v417
    %vm1540 = vcmp.lt.f32.partialorder %v1539, 0.0004427343
    %v1541 = vsel %vm1540, %v1538, %v1535
    %v1542 = vadd.f32 %v419, 1.0
    %v1543 = vlog2.pop %v1542
    %v1544 = vmul.f32 %v1543, 0.6931472
    %v1545 = vmul.f32 -0.5, %v419
    %v1546 = vadd.f32 %v1545, 1.0
    %v1547 = vmul.f32 %v1546, %v419
    %v1548 = vand.u32 2147483647, %v419
    %vm1549 = vcmp.lt.f32.partialorder %v1548, 0.0004427343
    %v1550 = vsel %vm1549, %v1547, %v1544
    %v1551 = vadd.f32 %v421, 1.0
    %v1552 = vlog2.pop %v1551
    %v1553 = vmul.f32 %v1552, 0.6931472
    %v1554 = vmul.f32 -0.5, %v421
    %v1555 = vadd.f32 %v1554, 1.0
    %v1556 = vmul.f32 %v1555, %v421
    %v1557 = vand.u32 2147483647, %v421
    %vm1558 = vcmp.lt.f32.partialorder %v1557, 0.0004427343
    %v1559 = vsel %vm1558, %v1556, %v1553
    %v1560 = vadd.f32 %v423, 1.0
    %v1561 = vlog2.pop %v1560
    %v1562 = vmul.f32 %v1561, 0.6931472
    %v1563 = vmul.f32 -0.5, %v423
    %v1564 = vadd.f32 %v1563, 1.0
    %v1565 = vmul.f32 %v1564, %v423
    %v1566 = vand.u32 2147483647, %v423
    %vm1567 = vcmp.lt.f32.partialorder %v1566, 0.0004427343
    %v1568 = vsel %vm1567, %v1565, %v1562
    %v1569 = vadd.f32 %v425, 1.0
    %v1570 = vlog2.pop %v1569
    %v1571 = vmul.f32 %v1570, 0.6931472
    %v1572 = vmul.f32 -0.5, %v425
    %v1573 = vadd.f32 %v1572, 1.0
    %v1574 = vmul.f32 %v1573, %v425
    %v1575 = vand.u32 2147483647, %v425
    %vm1576 = vcmp.lt.f32.partialorder %v1575, 0.0004427343
    %v1577 = vsel %vm1576, %v1574, %v1571
    %v1578 = vadd.f32 %v938, %v1010
    %v1579 = vadd.f32 %v939, %v1019
    %v1580 = vadd.f32 %v940, %v1028
    %v1581 = vadd.f32 %v941, %v1037
    %v1582 = vadd.f32 %v942, %v1046
    %v1583 = vadd.f32 %v943, %v1055
    %v1584 = vadd.f32 %v944, %v1064
    %v1585 = vadd.f32 %v945, %v1073
    %v1586 = vadd.f32 %v946, %v1082
    %v1587 = vadd.f32 %v947, %v1091
    %v1588 = vadd.f32 %v948, %v1100
    %v1589 = vadd.f32 %v949, %v1109
    %v1590 = vadd.f32 %v950, %v1118
    %v1591 = vadd.f32 %v951, %v1127
    %v1592 = vadd.f32 %v952, %v1136
    %v1593 = vadd.f32 %v953, %v1145
    %v1594 = vadd.f32 %v954, %v1154
    %v1595 = vadd.f32 %v955, %v1163
    %v1596 = vadd.f32 %v956, %v1172
    %v1597 = vadd.f32 %v957, %v1181
    %v1598 = vadd.f32 %v958, %v1190
    %v1599 = vadd.f32 %v959, %v1199
    %v1600 = vadd.f32 %v960, %v1208
    %v1601 = vadd.f32 %v961, %v1217
    %v1602 = vadd.f32 %v962, %v1226
    %v1603 = vadd.f32 %v963, %v1235
    %v1604 = vadd.f32 %v964, %v1244
    %v1605 = vadd.f32 %v965, %v1253
    %v1606 = vadd.f32 %v966, %v1262
    %v1607 = vadd.f32 %v967, %v1271
    %v1608 = vadd.f32 %v968, %v1280
    %v1609 = vadd.f32 %v969, %v1289
    %v1610 = vadd.f32 %v970, %v1298
    %v1611 = vadd.f32 %v971, %v1307
    %v1612 = vadd.f32 %v972, %v1316
    %v1613 = vadd.f32 %v973, %v1325
    %v1614 = vadd.f32 %v974, %v1334
    %v1615 = vadd.f32 %v975, %v1343
    %v1616 = vadd.f32 %v976, %v1352
    %v1617 = vadd.f32 %v977, %v1361
    %v1618 = vadd.f32 %v978, %v1370
    %v1619 = vadd.f32 %v979, %v1379
    %v1620 = vadd.f32 %v980, %v1388
    %v1621 = vadd.f32 %v981, %v1397
    %v1622 = vadd.f32 %v982, %v1406
    %v1623 = vadd.f32 %v983, %v1415
    %v1624 = vadd.f32 %v984, %v1424
    %v1625 = vadd.f32 %v985, %v1433
    %v1626 = vadd.f32 %v986, %v1442
    %v1627 = vadd.f32 %v987, %v1451
    %v1628 = vadd.f32 %v988, %v1460
    %v1629 = vadd.f32 %v989, %v1469
    %v1630 = vadd.f32 %v990, %v1478
    %v1631 = vadd.f32 %v991, %v1487
    %v1632 = vadd.f32 %v992, %v1496
    %v1633 = vadd.f32 %v993, %v1505
    %v1634 = vadd.f32 %v994, %v1514
    %v1635 = vadd.f32 %v995, %v1523
    %v1636 = vadd.f32 %v996, %v1532
    %v1637 = vadd.f32 %v997, %v1541
    %v1638 = vadd.f32 %v998, %v1550
    %v1639 = vadd.f32 %v999, %v1559
    %v1640 = vadd.f32 %v1000, %v1568
    %v1641 = vadd.f32 %v1001, %v1577
    %v1642 = vsub.f32 %v746, %v106
    %v1643 = vsub.f32 %v747, %v107
    %v1644 = vsub.f32 %v748, %v108
    %v1645 = vsub.f32 %v749, %v109
    %v1646 = vsub.f32 %v750, %v110
    %v1647 = vsub.f32 %v751, %v111
    %v1648 = vsub.f32 %v752, %v112
    %v1649 = vsub.f32 %v753, %v113
    %v1650 = vsub.f32 %v754, %v114
    %v1651 = vsub.f32 %v755, %v115
    %v1652 = vsub.f32 %v756, %v116
    %v1653 = vsub.f32 %v757, %v117
    %v1654 = vsub.f32 %v758, %v118
    %v1655 = vsub.f32 %v759, %v119
    %v1656 = vsub.f32 %v760, %v120
    %v1657 = vsub.f32 %v761, %v121
    %v1658 = vsub.f32 %v762, %v122
    %v1659 = vsub.f32 %v763, %v123
    %v1660 = vsub.f32 %v764, %v124
    %v1661 = vsub.f32 %v765, %v125
    %v1662 = vsub.f32 %v766, %v126
    %v1663 = vsub.f32 %v767, %v127
    %v1664 = vsub.f32 %v768, %v128
    %v1665 = vsub.f32 %v769, %v129
    %v1666 = vsub.f32 %v770, %v130
    %v1667 = vsub.f32 %v771, %v131
    %v1668 = vsub.f32 %v772, %v132
    %v1669 = vsub.f32 %v773, %v133
    %v1670 = vsub.f32 %v774, %v134
    %v1671 = vsub.f32 %v775, %v135
    %v1672 = vsub.f32 %v776, %v136
    %v1673 = vsub.f32 %v777, %v137
    %v1674 = vsub.f32 %v778, %v138
    %v1675 = vsub.f32 %v779, %v139
    %v1676 = vsub.f32 %v780, %v140
    %v1677 = vsub.f32 %v781, %v141
    %v1678 = vsub.f32 %v782, %v142
    %v1679 = vsub.f32 %v783, %v143
    %v1680 = vsub.f32 %v784, %v144
    %v1681 = vsub.f32 %v785, %v145
    %v1682 = vsub.f32 %v786, %v146
    %v1683 = vsub.f32 %v787, %v147
    %v1684 = vsub.f32 %v788, %v148
    %v1685 = vsub.f32 %v789, %v149
    %v1686 = vsub.f32 %v790, %v150
    %v1687 = vsub.f32 %v791, %v151
    %v1688 = vsub.f32 %v792, %v152
    %v1689 = vsub.f32 %v793, %v153
    %v1690 = vsub.f32 %v794, %v154
    %v1691 = vsub.f32 %v795, %v155
    %v1692 = vsub.f32 %v796, %v156
    %v1693 = vsub.f32 %v797, %v157
    %v1694 = vsub.f32 %v798, %v158
    %v1695 = vsub.f32 %v799, %v159
    %v1696 = vsub.f32 %v800, %v160
    %v1697 = vsub.f32 %v801, %v161
    %v1698 = vsub.f32 %v802, %v162
    %v1699 = vsub.f32 %v803, %v163
    %v1700 = vsub.f32 %v804, %v164
    %v1701 = vsub.f32 %v805, %v165
    %v1702 = vsub.f32 %v806, %v166
    %v1703 = vsub.f32 %v807, %v167
    %v1704 = vsub.f32 %v808, %v168
    %v1705 = vsub.f32 %v809, %v169
    %v1706 = vand.u32 2147483647, %v1642
    %v1707 = vand.u32 2147483647, %v1643
    %v1708 = vand.u32 2147483647, %v1644
    %v1709 = vand.u32 2147483647, %v1645
    %v1710 = vand.u32 2147483647, %v1646
    %v1711 = vand.u32 2147483647, %v1647
    %v1712 = vand.u32 2147483647, %v1648
    %v1713 = vand.u32 2147483647, %v1649
    %v1714 = vand.u32 2147483647, %v1650
    %v1715 = vand.u32 2147483647, %v1651
    %v1716 = vand.u32 2147483647, %v1652
    %v1717 = vand.u32 2147483647, %v1653
    %v1718 = vand.u32 2147483647, %v1654
    %v1719 = vand.u32 2147483647, %v1655
    %v1720 = vand.u32 2147483647, %v1656
    %v1721 = vand.u32 2147483647, %v1657
    %v1722 = vand.u32 2147483647, %v1658
    %v1723 = vand.u32 2147483647, %v1659
    %v1724 = vand.u32 2147483647, %v1660
    %v1725 = vand.u32 2147483647, %v1661
    %v1726 = vand.u32 2147483647, %v1662
    %v1727 = vand.u32 2147483647, %v1663
    %v1728 = vand.u32 2147483647, %v1664
    %v1729 = vand.u32 2147483647, %v1665
    %v1730 = vand.u32 2147483647, %v1666
    %v1731 = vand.u32 2147483647, %v1667
    %v1732 = vand.u32 2147483647, %v1668
    %v1733 = vand.u32 2147483647, %v1669
    %v1734 = vand.u32 2147483647, %v1670
    %v1735 = vand.u32 2147483647, %v1671
    %v1736 = vand.u32 2147483647, %v1672
    %v1737 = vand.u32 2147483647, %v1673
    %v1738 = vand.u32 2147483647, %v1674
    %v1739 = vand.u32 2147483647, %v1675
    %v1740 = vand.u32 2147483647, %v1676
    %v1741 = vand.u32 2147483647, %v1677
    %v1742 = vand.u32 2147483647, %v1678
    %v1743 = vand.u32 2147483647, %v1679
    %v1744 = vand.u32 2147483647, %v1680
    %v1745 = vand.u32 2147483647, %v1681
    %v1746 = vand.u32 2147483647, %v1682
    %v1747 = vand.u32 2147483647, %v1683
    %v1748 = vand.u32 2147483647, %v1684
    %v1749 = vand.u32 2147483647, %v1685
    %v1750 = vand.u32 2147483647, %v1686
    %v1751 = vand.u32 2147483647, %v1687
    %v1752 = vand.u32 2147483647, %v1688
    %v1753 = vand.u32 2147483647, %v1689
    %v1754 = vand.u32 2147483647, %v1690
    %v1755 = vand.u32 2147483647, %v1691
    %v1756 = vand.u32 2147483647, %v1692
    %v1757 = vand.u32 2147483647, %v1693
    %v1758 = vand.u32 2147483647, %v1694
    %v1759 = vand.u32 2147483647, %v1695
    %v1760 = vand.u32 2147483647, %v1696
    %v1761 = vand.u32 2147483647, %v1697
    %v1762 = vand.u32 2147483647, %v1698
    %v1763 = vand.u32 2147483647, %v1699
    %v1764 = vand.u32 2147483647, %v1700
    %v1765 = vand.u32 2147483647, %v1701
    %v1766 = vand.u32 2147483647, %v1702
    %v1767 = vand.u32 2147483647, %v1703
    %v1768 = vand.u32 2147483647, %v1704
    %v1769 = vand.u32 2147483647, %v1705
    %v1770 = vmul.f32 %v1706, %v1706
    %v1771 = vmul.f32 %v1707, %v1707
    %v1772 = vmul.f32 %v1708, %v1708
    %v1773 = vmul.f32 %v1709, %v1709
    %v1774 = vmul.f32 %v1710, %v1710
    %v1775 = vmul.f32 %v1711, %v1711
    %v1776 = vmul.f32 %v1712, %v1712
    %v1777 = vmul.f32 %v1713, %v1713
    %v1778 = vmul.f32 %v1714, %v1714
    %v1779 = vmul.f32 %v1715, %v1715
    %v1780 = vmul.f32 %v1716, %v1716
    %v1781 = vmul.f32 %v1717, %v1717
    %v1782 = vmul.f32 %v1718, %v1718
    %v1783 = vmul.f32 %v1719, %v1719
    %v1784 = vmul.f32 %v1720, %v1720
    %v1785 = vmul.f32 %v1721, %v1721
    %v1786 = vmul.f32 %v1722, %v1722
    %v1787 = vmul.f32 %v1723, %v1723
    %v1788 = vmul.f32 %v1724, %v1724
    %v1789 = vmul.f32 %v1725, %v1725
    %v1790 = vmul.f32 %v1726, %v1726
    %v1791 = vmul.f32 %v1727, %v1727
    %v1792 = vmul.f32 %v1728, %v1728
    %v1793 = vmul.f32 %v1729, %v1729
    %v1794 = vmul.f32 %v1730, %v1730
    %v1795 = vmul.f32 %v1731, %v1731
    %v1796 = vmul.f32 %v1732, %v1732
    %v1797 = vmul.f32 %v1733, %v1733
    %v1798 = vmul.f32 %v1734, %v1734
    %v1799 = vmul.f32 %v1735, %v1735
    %v1800 = vmul.f32 %v1736, %v1736
    %v1801 = vmul.f32 %v1737, %v1737
    %v1802 = vmul.f32 %v1738, %v1738
    %v1803 = vmul.f32 %v1739, %v1739
    %v1804 = vmul.f32 %v1740, %v1740
    %v1805 = vmul.f32 %v1741, %v1741
    %v1806 = vmul.f32 %v1742, %v1742
    %v1807 = vmul.f32 %v1743, %v1743
    %v1808 = vmul.f32 %v1744, %v1744
    %v1809 = vmul.f32 %v1745, %v1745
    %v1810 = vmul.f32 %v1746, %v1746
    %v1811 = vmul.f32 %v1747, %v1747
    %v1812 = vmul.f32 %v1748, %v1748
    %v1813 = vmul.f32 %v1749, %v1749
    %v1814 = vmul.f32 %v1750, %v1750
    %v1815 = vmul.f32 %v1751, %v1751
    %v1816 = vmul.f32 %v1752, %v1752
    %v1817 = vmul.f32 %v1753, %v1753
    %v1818 = vmul.f32 %v1754, %v1754
    %v1819 = vmul.f32 %v1755, %v1755
    %v1820 = vmul.f32 %v1756, %v1756
    %v1821 = vmul.f32 %v1757, %v1757
    %v1822 = vmul.f32 %v1758, %v1758
    %v1823 = vmul.f32 %v1759, %v1759
    %v1824 = vmul.f32 %v1760, %v1760
    %v1825 = vmul.f32 %v1761, %v1761
    %v1826 = vmul.f32 %v1762, %v1762
    %v1827 = vmul.f32 %v1763, %v1763
    %v1828 = vmul.f32 %v1764, %v1764
    %v1829 = vmul.f32 %v1765, %v1765
    %v1830 = vmul.f32 %v1766, %v1766
    %v1831 = vmul.f32 %v1767, %v1767
    %v1832 = vmul.f32 %v1768, %v1768
    %v1833 = vmul.f32 %v1769, %v1769
    %v1834 = vmul.f32 %v1578, %v1770
    %v1835 = vmul.f32 %v1579, %v1771
    %v1836 = vmul.f32 %v1580, %v1772
    %v1837 = vmul.f32 %v1581, %v1773
    %v1838 = vmul.f32 %v1582, %v1774
    %v1839 = vmul.f32 %v1583, %v1775
    %v1840 = vmul.f32 %v1584, %v1776
    %v1841 = vmul.f32 %v1585, %v1777
    %v1842 = vmul.f32 %v1586, %v1778
    %v1843 = vmul.f32 %v1587, %v1779
    %v1844 = vmul.f32 %v1588, %v1780
    %v1845 = vmul.f32 %v1589, %v1781
    %v1846 = vmul.f32 %v1590, %v1782
    %v1847 = vmul.f32 %v1591, %v1783
    %v1848 = vmul.f32 %v1592, %v1784
    %v1849 = vmul.f32 %v1593, %v1785
    %v1850 = vmul.f32 %v1594, %v1786
    %v1851 = vmul.f32 %v1595, %v1787
    %v1852 = vmul.f32 %v1596, %v1788
    %v1853 = vmul.f32 %v1597, %v1789
    %v1854 = vmul.f32 %v1598, %v1790
    %v1855 = vmul.f32 %v1599, %v1791
    %v1856 = vmul.f32 %v1600, %v1792
    %v1857 = vmul.f32 %v1601, %v1793
    %v1858 = vmul.f32 %v1602, %v1794
    %v1859 = vmul.f32 %v1603, %v1795
    %v1860 = vmul.f32 %v1604, %v1796
    %v1861 = vmul.f32 %v1605, %v1797
    %v1862 = vmul.f32 %v1606, %v1798
    %v1863 = vmul.f32 %v1607, %v1799
    %v1864 = vmul.f32 %v1608, %v1800
    %v1865 = vmul.f32 %v1609, %v1801
    %v1866 = vmul.f32 %v1610, %v1802
    %v1867 = vmul.f32 %v1611, %v1803
    %v1868 = vmul.f32 %v1612, %v1804
    %v1869 = vmul.f32 %v1613, %v1805
    %v1870 = vmul.f32 %v1614, %v1806
    %v1871 = vmul.f32 %v1615, %v1807
    %v1872 = vmul.f32 %v1616, %v1808
    %v1873 = vmul.f32 %v1617, %v1809
    %v1874 = vmul.f32 %v1618, %v1810
    %v1875 = vmul.f32 %v1619, %v1811
    %v1876 = vmul.f32 %v1620, %v1812
    %v1877 = vmul.f32 %v1621, %v1813
    %v1878 = vmul.f32 %v1622, %v1814
    %v1879 = vmul.f32 %v1623, %v1815
    %v1880 = vmul.f32 %v1624, %v1816
    %v1881 = vmul.f32 %v1625, %v1817
    %v1882 = vmul.f32 %v1626, %v1818
    %v1883 = vmul.f32 %v1627, %v1819
    %v1884 = vmul.f32 %v1628, %v1820
    %v1885 = vmul.f32 %v1629, %v1821
    %v1886 = vmul.f32 %v1630, %v1822
    %v1887 = vmul.f32 %v1631, %v1823
    %v1888 = vmul.f32 %v1632, %v1824
    %v1889 = vmul.f32 %v1633, %v1825
    %v1890 = vmul.f32 %v1634, %v1826
    %v1891 = vmul.f32 %v1635, %v1827
    %v1892 = vmul.f32 %v1636, %v1828
    %v1893 = vmul.f32 %v1637, %v1829
    %v1894 = vmul.f32 %v1638, %v1830
    %v1895 = vmul.f32 %v1639, %v1831
    %v1896 = vmul.f32 %v1640, %v1832
    %v1897 = vmul.f32 %v1641, %v1833
    %s1898 = sld [smem:[#allocation3]]
    %v1899 = vstv %s1898
    %v1900 = vmul.f32 %v1834, %v1899
    %v1901 = vmul.f32 %v1835, %v1899
    %v1902 = vmul.f32 %v1836, %v1899
    %v1903 = vmul.f32 %v1837, %v1899
    %v1904 = vmul.f32 %v1838, %v1899
    %v1905 = vmul.f32 %v1839, %v1899
    %v1906 = vmul.f32 %v1840, %v1899
    %v1907 = vmul.f32 %v1841, %v1899
    %v1908 = vmul.f32 %v1842, %v1899
    %v1909 = vmul.f32 %v1843, %v1899
    %v1910 = vmul.f32 %v1844, %v1899
    %v1911 = vmul.f32 %v1845, %v1899
    %v1912 = vmul.f32 %v1846, %v1899
    %v1913 = vmul.f32 %v1847, %v1899
    %v1914 = vmul.f32 %v1848, %v1899
    %v1915 = vmul.f32 %v1849, %v1899
    %v1916 = vmul.f32 %v1850, %v1899
    %v1917 = vmul.f32 %v1851, %v1899
    %v1918 = vmul.f32 %v1852, %v1899
    %v1919 = vmul.f32 %v1853, %v1899
    %v1920 = vmul.f32 %v1854, %v1899
    %v1921 = vmul.f32 %v1855, %v1899
    %v1922 = vmul.f32 %v1856, %v1899
    %v1923 = vmul.f32 %v1857, %v1899
    %v1924 = vmul.f32 %v1858, %v1899
    %v1925 = vmul.f32 %v1859, %v1899
    %v1926 = vmul.f32 %v1860, %v1899
    %v1927 = vmul.f32 %v1861, %v1899
    %v1928 = vmul.f32 %v1862, %v1899
    %v1929 = vmul.f32 %v1863, %v1899
    %v1930 = vmul.f32 %v1864, %v1899
    %v1931 = vmul.f32 %v1865, %v1899
    %v1932 = vmul.f32 %v1866, %v1899
    %v1933 = vmul.f32 %v1867, %v1899
    %v1934 = vmul.f32 %v1868, %v1899
    %v1935 = vmul.f32 %v1869, %v1899
    %v1936 = vmul.f32 %v1870, %v1899
    %v1937 = vmul.f32 %v1871, %v1899
    %v1938 = vmul.f32 %v1872, %v1899
    %v1939 = vmul.f32 %v1873, %v1899
    %v1940 = vmul.f32 %v1874, %v1899
    %v1941 = vmul.f32 %v1875, %v1899
    %v1942 = vmul.f32 %v1876, %v1899
    %v1943 = vmul.f32 %v1877, %v1899
    %v1944 = vmul.f32 %v1878, %v1899
    %v1945 = vmul.f32 %v1879, %v1899
    %v1946 = vmul.f32 %v1880, %v1899
    %v1947 = vmul.f32 %v1881, %v1899
    %v1948 = vmul.f32 %v1882, %v1899
    %v1949 = vmul.f32 %v1883, %v1899
    %v1950 = vmul.f32 %v1884, %v1899
    %v1951 = vmul.f32 %v1885, %v1899
    %v1952 = vmul.f32 %v1886, %v1899
    %v1953 = vmul.f32 %v1887, %v1899
    %v1954 = vmul.f32 %v1888, %v1899
    %v1955 = vmul.f32 %v1889, %v1899
    %v1956 = vmul.f32 %v1890, %v1899
    %v1957 = vmul.f32 %v1891, %v1899
    %v1958 = vmul.f32 %v1892, %v1899
    %v1959 = vmul.f32 %v1893, %v1899
    %v1960 = vmul.f32 %v1894, %v1899
    %v1961 = vmul.f32 %v1895, %v1899
    %v1962 = vmul.f32 %v1896, %v1899
    %v1963 = vmul.f32 %v1897, %v1899
    %1964 = vst [vmem:[#allocation9] sm:$0xff] %v1900
    %1965 = vst [vmem:[#allocation9 + $0x8] sm:$0xff] %v1901
    %1966 = vst [vmem:[#allocation9 + $0x10] sm:$0xff] %v1902
    %1967 = vst [vmem:[#allocation9 + $0x18] sm:$0xff] %v1903
    %1968 = vst [vmem:[#allocation9 + $0x20] sm:$0xff] %v1904
    %1969 = vst [vmem:[#allocation9 + $0x28] sm:$0xff] %v1905
    %1970 = vst [vmem:[#allocation9 + $0x30] sm:$0xff] %v1906
    %1971 = vst [vmem:[#allocation9 + $0x38] sm:$0xff] %v1907
    %1972 = vst [vmem:[#allocation9 + $0x40] sm:$0xff] %v1908
    %1973 = vst [vmem:[#allocation9 + $0x48] sm:$0xff] %v1909
    %1974 = vst [vmem:[#allocation9 + $0x50] sm:$0xff] %v1910
    %1975 = vst [vmem:[#allocation9 + $0x58] sm:$0xff] %v1911
    %1976 = vst [vmem:[#allocation9 + $0x60] sm:$0xff] %v1912
    %1977 = vst [vmem:[#allocation9 + $0x68] sm:$0xff] %v1913
    %1978 = vst [vmem:[#allocation9 + $0x70] sm:$0xff] %v1914
    %1979 = vst [vmem:[#allocation9 + $0x78] sm:$0xff] %v1915
    %1980 = vst [vmem:[#allocation9 + $0x80] sm:$0xff] %v1916
    %1981 = vst [vmem:[#allocation9 + $0x88] sm:$0xff] %v1917
    %1982 = vst [vmem:[#allocation9 + $0x90] sm:$0xff] %v1918
    %1983 = vst [vmem:[#allocation9 + $0x98] sm:$0xff] %v1919
    %1984 = vst [vmem:[#allocation9 + $0xa0] sm:$0xff] %v1920
    %1985 = vst [vmem:[#allocation9 + $0xa8] sm:$0xff] %v1921
    %1986 = vst [vmem:[#allocation9 + $0xb0] sm:$0xff] %v1922
    %1987 = vst [vmem:[#allocation9 + $0xb8] sm:$0xff] %v1923
    %1988 = vst [vmem:[#allocation9 + $0xc0] sm:$0xff] %v1924
    %1989 = vst [vmem:[#allocation9 + $0xc8] sm:$0xff] %v1925
    %1990 = vst [vmem:[#allocation9 + $0xd0] sm:$0xff] %v1926
    %1991 = vst [vmem:[#allocation9 + $0xd8] sm:$0xff] %v1927
    %1992 = vst [vmem:[#allocation9 + $0xe0] sm:$0xff] %v1928
    %1993 = vst [vmem:[#allocation9 + $0xe8] sm:$0xff] %v1929
    %1994 = vst [vmem:[#allocation9 + $0xf0] sm:$0xff] %v1930
    %1995 = vst [vmem:[#allocation9 + $0xf8] sm:$0xff] %v1931
    %1996 = vst [vmem:[#allocation9 + $0x100] sm:$0xff] %v1932
    %1997 = vst [vmem:[#allocation9 + $0x108] sm:$0xff] %v1933
    %1998 = vst [vmem:[#allocation9 + $0x110] sm:$0xff] %v1934
    %1999 = vst [vmem:[#allocation9 + $0x118] sm:$0xff] %v1935
    %2000 = vst [vmem:[#allocation9 + $0x120] sm:$0xff] %v1936
    %2001 = vst [vmem:[#allocation9 + $0x128] sm:$0xff] %v1937
    %2002 = vst [vmem:[#allocation9 + $0x130] sm:$0xff] %v1938
    %2003 = vst [vmem:[#allocation9 + $0x138] sm:$0xff] %v1939
    %2004 = vst [vmem:[#allocation9 + $0x140] sm:$0xff] %v1940
    %2005 = vst [vmem:[#allocation9 + $0x148] sm:$0xff] %v1941
    %2006 = vst [vmem:[#allocation9 + $0x150] sm:$0xff] %v1942
    %2007 = vst [vmem:[#allocation9 + $0x158] sm:$0xff] %v1943
    %2008 = vst [vmem:[#allocation9 + $0x160] sm:$0xff] %v1944
    %2009 = vst [vmem:[#allocation9 + $0x168] sm:$0xff] %v1945
    %2010 = vst [vmem:[#allocation9 + $0x170] sm:$0xff] %v1946
    %2011 = vst [vmem:[#allocation9 + $0x178] sm:$0xff] %v1947
    %2012 = vst [vmem:[#allocation9 + $0x180] sm:$0xff] %v1948
    %2013 = vst [vmem:[#allocation9 + $0x188] sm:$0xff] %v1949
    %2014 = vst [vmem:[#allocation9 + $0x190] sm:$0xff] %v1950
    %2015 = vst [vmem:[#allocation9 + $0x198] sm:$0xff] %v1951
    %2016 = vst [vmem:[#allocation9 + $0x1a0] sm:$0xff] %v1952
    %2017 = vst [vmem:[#allocation9 + $0x1a8] sm:$0xff] %v1953
    %2018 = vst [vmem:[#allocation9 + $0x1b0] sm:$0xff] %v1954
    %2019 = vst [vmem:[#allocation9 + $0x1b8] sm:$0xff] %v1955
    %2020 = vst [vmem:[#allocation9 + $0x1c0] sm:$0xff] %v1956
    %2021 = vst [vmem:[#allocation9 + $0x1c8] sm:$0xff] %v1957
    %2022 = vst [vmem:[#allocation9 + $0x1d0] sm:$0xff] %v1958
    %2023 = vst [vmem:[#allocation9 + $0x1d8] sm:$0xff] %v1959
    %2024 = vst [vmem:[#allocation9 + $0x1e0] sm:$0xff] %v1960
    %2025 = vst [vmem:[#allocation9 + $0x1e8] sm:$0xff] %v1961
    %2026 = vst [vmem:[#allocation9 + $0x1f0] sm:$0xff] %v1962
    %2027 = vst [vmem:[#allocation9 + $0x1f8] sm:$0xff] %v1963
    // Predicated region
    $region18: #{tpu_custom_call.1} parent=1 // pred_check
      _
    $region19: #{tpu_custom_call.1} parent=1 // pred_check_branch
      %2029 = sbr.rel (0) target = $region21
    $region20: #{tpu_custom_call.1} parent=1 // pred_region
      %s2031 = ssub.s32 8192, 8192
      %2032 = vsyncadd [#allocation6], %s2031
      %s2033 = sshll.u32 [#allocation9], 4
      %s2034 = int_to_ptr.vmem [resolvable:$true] %s2033
      %2039 = dma.vmem_to_hbm [thread:$0]  %s2034, 8192, %s3, [#allocation6], 128, 128, 8
    $region21: #{tpu_custom_call.1} parent=1 // pred_fallthru
      _
    // Predicated region
    $region22: #{tpu_custom_call.1} parent=1 // pred_check
      _
    $region23: #{tpu_custom_call.1} parent=1 // pred_check_branch
      %2041 = sbr.rel (0) target = $region25
    $region24: #{tpu_custom_call.1} parent=1 // pred_region
      %2042 = dma.done [#allocation6], 8192
    $region25: #{tpu_custom_call.1} parent=1 // pred_fallthru
      _
    %2043 = vsyncpa [#allocation5], 1
    %2044 = vsyncpa [#allocation8], 1
    %2045 = vsyncpa [#allocation6], 1

</llo_original>
